<compile_context>
chip_gen: v6e
topology: v6e:2x2x1
jax: 0.10.0
libtpu: 0.0.40
codegen_flags: <defaults>
</compile_context>

<pallas_src>
import functools

import jax
import jax.numpy as jnp
from jax.experimental import pallas as pl
from jax.experimental.pallas import tpu as pltpu


# --------------------------------------------------------------------------- #
# Helpers: padded-VMEM accounting and block-size selection
# --------------------------------------------------------------------------- #
def _round_up(n, m):
    return ((n + m - 1) // m) * m


def _sublane_tile(dtype):
    # Sub-32-bit dtypes pack along sublanes: 8 for 4-byte, 16 for 2-byte,
    # 32 for 1-byte dtypes.
    return max(8, 32 // jnp.dtype(dtype).itemsize)


def _padded_tile_bytes(rows, cols, dtype, leading=1):
    """VMEM bytes of a (leading, rows, cols) block after (sublane, 128) padding."""
    it = jnp.dtype(dtype).itemsize
    sub = _sublane_tile(dtype)
    return leading * _round_up(rows, sub) * _round_up(cols, 128) * it


def _vmem_capacity_bytes():
    try:
        return int(pltpu.get_tpu_info().vmem_capacity_bytes)
    except Exception:
        return 64 << 20  # conservative fallback: v7x per-TensorCore VMEM


def _vmem_footprint(b_blk, c_blk, *, s, Hh, W, Ww, Wp, x_dtype, mm_dtype):
    """Padded, double-buffered VMEM working set of one grid step."""
    nsub = s * s
    rows = c_blk * Hh
    in_blk = _padded_tile_bytes(rows, s * W, x_dtype, leading=b_blk)
    out_blk = _padded_tile_bytes(rows, Ww, x_dtype, leading=b_blk * nsub)
    sel = _padded_tile_bytes(s * W, nsub * Wp, mm_dtype)
    res = _padded_tile_bytes(rows, nsub * Wp, mm_dtype, leading=b_blk)
    # 2x for double-buffered input/output pipelining; selection matrix counted
    # twice to be safe; one in-flight matmul result.
    return 2 * (in_blk + out_blk) + 2 * sel + res


def _pick_blocks(B, C, *, s, Hh, W, Ww, Wp, x_dtype, mm_dtype, budget):
    """Choose (b_blk, c_blk): biggest blocks whose PADDED footprint fits budget."""
    sub = _sublane_tile(x_dtype)

    def fp(b, c):
        return _vmem_footprint(b, c, s=s, Hh=Hh, W=W, Ww=Ww, Wp=Wp,
                               x_dtype=x_dtype, mm_dtype=mm_dtype)

    def c_aligned(d):
        return d == C or (d * Hh) % sub == 0

    c_divs = [d for d in range(1, C + 1) if C % d == 0 and c_aligned(d)]
    if not c_divs:
        c_divs = [C]
    fits = [d for d in c_divs if fp(1, d) <= budget]
    # Fallback: smallest aligned block (vmem_limit is raised to cover it so we
    # degrade to spills rather than refuse to compile).
    c_blk = max(fits) if fits else min(c_divs)

    # Fuse batch into the block when the per-step payload is small, but always
    # keep >= 2 parallel grid steps (v7x has 2 TensorCores).
    b_blk = 1
    if c_blk == C and B > 1:
        for d in sorted(d for d in range(2, B + 1) if B % d == 0):
            if fp(d, c_blk) > budget or (B // d) * (C // c_blk) < 2:
                break
            b_blk = d
            if _padded_tile_bytes(c_blk * Hh, s * W, x_dtype, leading=d) >= (4 << 20):
                break

    # If the grid collapsed to a single step, split the channel axis instead
    # (one extra ~0.35us step on single-TC chips, half-chip-idle fix on v7x).
    if (B // b_blk) * (C // c_blk) < 2:
        smaller = [d for d in c_divs if d < c_blk and fp(b_blk, d) <= budget]
        if smaller:
            c_blk = max(smaller)

    return b_blk, c_blk


# --------------------------------------------------------------------------- #
# Kernel
# --------------------------------------------------------------------------- #
def _reorg_kernel(s_ref, x_ref, o_ref, *, b_blk, nsub, Ww, Wp, precision):
    """One (batch-block, channel-block) grid step.

    s_ref: (s*W, nsub*Wp)             hoisted 0/1 selection matrix (constant block)
    x_ref: (b_blk, c_blk*Hh, s*W)     fused-channel input slab(s)
    o_ref: (b_blk, nsub, c_blk*Hh, Ww) staged reorganized output
    """
    S = s_ref[...]
    for b in range(b_blk):
        rows = x_ref[b]  # (c_blk*Hh, s*W)
        if rows.dtype != S.dtype:
            # TODO(synk): integer dtypes ride the f32 MXU path; exact only for
            # |x| < 2**24 -- wide integers would need a non-MXU gather path.
            rows = rows.astype(S.dtype)
        # One MXU pass extracts every (i, j) parity: (c_blk*Hh, nsub*Wp).
        cols = jnp.dot(rows, S, preferred_element_type=S.dtype, precision=precision)
        for p in range(nsub):
            chunk = cols[:, p * Wp:p * Wp + Ww]  # 128-aligned slice start
            if chunk.dtype != o_ref.dtype:
                chunk = chunk.astype(o_ref.dtype)
            o_ref[b, p, :, :] = chunk


# --------------------------------------------------------------------------- #
# Wrapper
# --------------------------------------------------------------------------- #
def reorg_layer(x, stride=2):
    """Pallas TPU equivalent of ReorgLayer.forward (NCHW in, NCHW out)."""
    assert x.ndim == 4
    B, C, H, W = x.shape
    s = int(stride)
    assert H % s == 0 and W % s == 0
    Hh, Ww = H // s, W // s
    nsub = s * s
    # Each parity's column group padded to a 128-lane boundary.
    Wp = _round_up(Ww, 128)

    if x.dtype == jnp.bfloat16:
        # 0/1 selection passes bf16 through exactly; keep the MXU result in bf16
        # (halves result-pop / store traffic vs f32 + astype).
        mm_dtype, precision = jnp.bfloat16, None
    else:
        # f32 (and ints routed through f32): exact precision so this pure
        # permutation is bit-preserving; extra MXU passes are hidden (tiny K).
        mm_dtype, precision = jnp.float32, jax.lax.Precision.HIGHEST

    # Hoisted selection matrix: S[k, p*Wp + w'] = 1 iff w' < Ww and
    # k == i*W + w'*s + j with p = i*s + j.
    k_idx = jnp.arange(s * W, dtype=jnp.int32)[:, None]        # (s*W, 1)
    col = jnp.arange(nsub * Wp, dtype=jnp.int32)[None, :]      # (1, nsub*Wp)
    par, wq = col // Wp, col % Wp
    i, j = par // s, par % s
    S = ((k_idx == i * W + wq * s + j) & (wq < Ww)).astype(mm_dtype)

    # Free view: channels fused onto sublanes, both row parities onto lanes.
    xv = x.reshape(B, C * Hh, s * W)

    cap = _vmem_capacity_bytes()
    budget = (cap * 3) // 8  # 24 MiB on v7x (64 MiB), 48 MiB on v5e/v6e (128 MiB)
    b_blk, c_blk = _pick_blocks(B, C, s=s, Hh=Hh, W=W, Ww=Ww, Wp=Wp,
                                x_dtype=x.dtype, mm_dtype=mm_dtype, budget=budget)
    footprint = _vmem_footprint(b_blk, c_blk, s=s, Hh=Hh, W=W, Ww=Ww, Wp=Wp,
                                x_dtype=x.dtype, mm_dtype=mm_dtype)
    vmem_limit = int(max((cap * 3) // 4,
                         min(footprint + (8 << 20), (cap * 15) // 16)))

    grid = (B // b_blk, C // c_blk)
    kernel = functools.partial(_reorg_kernel, b_blk=b_blk, nsub=nsub,
                               Ww=Ww, Wp=Wp, precision=precision)

    staged = pl.pallas_call(
        kernel,
        out_shape=jax.ShapeDtypeStruct((B, nsub, C * Hh, Ww), x.dtype),
        grid_spec=pltpu.PrefetchScalarGridSpec(
            num_scalar_prefetch=0,
            grid=grid,
            in_specs=[
                # Selection matrix: constant block index -> DMA'd once, reused.
                pl.BlockSpec((s * W, nsub * Wp), lambda bi, ci: (0, 0)),
                # Fused-channel input slab(s): (b_blk, c_blk*Hh, s*W).
                pl.BlockSpec((b_blk, c_blk * Hh, s * W),
                             lambda bi, ci: (bi, ci, 0)),
            ],
            out_specs=pl.BlockSpec((b_blk, nsub, c_blk * Hh, Ww),
                                   lambda bi, ci: (bi, 0, ci, 0)),
        ),
        compiler_params=pltpu.CompilerParams(
            dimension_semantics=("parallel", "parallel"),
            vmem_limit_bytes=vmem_limit,
        ),
    )(S, xv)

    # Free glue reshape: (B, s*s, C*Hh, Ww) -> (B, s*s*C, Hh, Ww).
    return staged.reshape(B, nsub * C, Hh, Ww)


def reorg_reference(x, stride=2):
    """Pure-JAX reference matching the PyTorch ReorgLayer semantics."""
    B, C, H, W = x.shape
    s = stride
    Hh, Ww = H // s, W // s
    y = x.reshape(B, C, Hh, s, Ww, s)
    y = jnp.transpose(y, (0, 3, 5, 1, 2, 4))  # (B, i, j, C, Hh, Ww)
    return y.reshape(B, s * s * C, Hh, Ww)


if __name__ == "__main__":
    key = jax.random.PRNGKey(0)
    B, C, H, W = 2, 4, 16, 16
    x = jax.random.normal(key, (B, C, H, W), dtype=jnp.float32)

    out = jax.block_until_ready(reorg_layer(x, stride=2))

    ref = reorg_reference(x, stride=2)
    assert out.shape == (B, 4 * C, H // 2, W // 2), out.shape
    assert jnp.allclose(out, ref, atol=1e-5, rtol=1e-5), "mismatch vs reference"

    print("KERNEL_OK")
</pallas_src>

<mosaic_0001>
module attributes {stable_mosaic.version = 11 : i64} {
  func.func @_reorg_kernel(%arg0: i32, %arg1: i32, %arg2: memref<32x512xf32, #tpu.memory_space<vmem>>, %arg3: memref<1x32x32xf32, #tpu.memory_space<vmem>>, %arg4: memref<1x4x32x8xf32, #tpu.memory_space<vmem>>) attributes {dimension_semantics = [#tpu.dimension_semantics<parallel>, #tpu.dimension_semantics<parallel>], iteration_bounds = array<i64: 2, 1>, scalar_prefetch = 0 : i64, scratch_operands = 0 : i64, tpu.core_type = #tpu.core_type<tc>, window_params = [{pipeline_mode = #tpu.pipeline_mode<synchronous>, transform_indices = @transform_0, window_bounds = array<i64: 32, 512>}, {transform_indices = @transform_1, window_bounds = array<i64: 1, 32, 32>}, {transform_indices = @transform_2, window_bounds = array<i64: 1, 4, 32, 8>}]} {
    %c0 = arith.constant 0 : index
    %c0_0 = arith.constant 0 : index
    %0 = vector.load %arg2[%c0, %c0_0] : memref<32x512xf32, #tpu.memory_space<vmem>>, vector<32x512xf32>
    %c0_1 = arith.constant 0 : index
    %c0_2 = arith.constant 0 : index
    %c0_3 = arith.constant 0 : index
    %1 = vector.load %arg3[%c0_1, %c0_2, %c0_3] : memref<1x32x32xf32, #tpu.memory_space<vmem>>, vector<1x32x32xf32>
    %2 = vector.shape_cast %1 : vector<1x32x32xf32> to vector<32x32xf32>
    %cst = arith.constant dense<0.000000e+00> : vector<32x512xf32>
    %3 = tpu.matmul %2, %0, %cst {dimension_numbers = #tpu.dot_dimension_numbers<[1], [0], [0], [1], [0, 0, 1, 1], [], []>, precision = #tpu.contract_precision<fp32>} : vector<32x32xf32>, vector<32x512xf32>, vector<32x512xf32> -> vector<32x512xf32>
    %4 = vector.extract_strided_slice %3 {offsets = [0, 0], sizes = [32, 8], strides = [1, 1]} : vector<32x512xf32> to vector<32x8xf32>
    %c0_4 = arith.constant 0 : index
    %c0_5 = arith.constant 0 : index
    %c0_6 = arith.constant 0 : index
    %c0_7 = arith.constant 0 : index
    %5 = vector.load %arg4[%c0_4, %c0_5, %c0_6, %c0_7] : memref<1x4x32x8xf32, #tpu.memory_space<vmem>>, vector<1x1x32x8xf32>
    %6 = vector.shape_cast %5 : vector<1x1x32x8xf32> to vector<32x8xf32>
    %7 = vector.shape_cast %4 : vector<32x8xf32> to vector<1x1x32x8xf32>
    tpu.vector_store %arg4[%c0_4, %c0_5, %c0_6, %c0_7], %7 {strides = array<i32>} : memref<1x4x32x8xf32, #tpu.memory_space<vmem>>, vector<1x1x32x8xf32>,
    %8 = vector.extract_strided_slice %3 {offsets = [0, 128], sizes = [32, 8], strides = [1, 1]} : vector<32x512xf32> to vector<32x8xf32>
    %c0_8 = arith.constant 0 : index
    %c1 = arith.constant 1 : index
    %c0_9 = arith.constant 0 : index
    %c0_10 = arith.constant 0 : index
    %9 = vector.load %arg4[%c0_8, %c1, %c0_9, %c0_10] : memref<1x4x32x8xf32, #tpu.memory_space<vmem>>, vector<1x1x32x8xf32>
    %10 = vector.shape_cast %9 : vector<1x1x32x8xf32> to vector<32x8xf32>
    %11 = vector.shape_cast %8 : vector<32x8xf32> to vector<1x1x32x8xf32>
    tpu.vector_store %arg4[%c0_8, %c1, %c0_9, %c0_10], %11 {strides = array<i32>} : memref<1x4x32x8xf32, #tpu.memory_space<vmem>>, vector<1x1x32x8xf32>,
    %12 = vector.extract_strided_slice %3 {offsets = [0, 256], sizes = [32, 8], strides = [1, 1]} : vector<32x512xf32> to vector<32x8xf32>
    %c0_11 = arith.constant 0 : index
    %c2 = arith.constant 2 : index
    %c0_12 = arith.constant 0 : index
    %c0_13 = arith.constant 0 : index
    %13 = vector.load %arg4[%c0_11, %c2, %c0_12, %c0_13] : memref<1x4x32x8xf32, #tpu.memory_space<vmem>>, vector<1x1x32x8xf32>
    %14 = vector.shape_cast %13 : vector<1x1x32x8xf32> to vector<32x8xf32>
    %15 = vector.shape_cast %12 : vector<32x8xf32> to vector<1x1x32x8xf32>
    tpu.vector_store %arg4[%c0_11, %c2, %c0_12, %c0_13], %15 {strides = array<i32>} : memref<1x4x32x8xf32, #tpu.memory_space<vmem>>, vector<1x1x32x8xf32>,
    %16 = vector.extract_strided_slice %3 {offsets = [0, 384], sizes = [32, 8], strides = [1, 1]} : vector<32x512xf32> to vector<32x8xf32>
    %c0_14 = arith.constant 0 : index
    %c3 = arith.constant 3 : index
    %c0_15 = arith.constant 0 : index
    %c0_16 = arith.constant 0 : index
    %17 = vector.load %arg4[%c0_14, %c3, %c0_15, %c0_16] : memref<1x4x32x8xf32, #tpu.memory_space<vmem>>, vector<1x1x32x8xf32>
    %18 = vector.shape_cast %17 : vector<1x1x32x8xf32> to vector<32x8xf32>
    %19 = vector.shape_cast %16 : vector<32x8xf32> to vector<1x1x32x8xf32>
    tpu.vector_store %arg4[%c0_14, %c3, %c0_15, %c0_16], %19 {strides = array<i32>} : memref<1x4x32x8xf32, #tpu.memory_space<vmem>>, vector<1x1x32x8xf32>,
    return
  }
  func.func @transform_0(%arg0: i32, %arg1: i32) -> (i32, i32) {
    %c0_i32 = arith.constant 0 : i32
    %c0_i32_0 = arith.constant 0 : i32
    %c0_i32_1 = arith.constant 0 : i32
    return %c0_i32, %c0_i32_0 : i32, i32
  }
  func.func @transform_1(%arg0: i32, %arg1: i32) -> (i32, i32, i32) {
    %c0_i32 = arith.constant 0 : i32
    %c0_i32_0 = arith.constant 0 : i32
    return %arg0, %arg1, %c0_i32 : i32, i32, i32
  }
  func.func @transform_2(%arg0: i32, %arg1: i32) -> (i32, i32, i32, i32) {
    %c0_i32 = arith.constant 0 : i32
    %c0_i32_0 = arith.constant 0 : i32
    %c0_i32_1 = arith.constant 0 : i32
    return %arg0, %c0_i32, %arg1, %c0_i32_0 : i32, i32, i32, i32
  }
}

</mosaic_0001>

<llo_original>
// kernel: tpu_custom_call.1
$region0: #{tpu_custom_call.1}
  #allocation0 [shape = 'u32[]', space=smem, size = 0x4, offset = 0x4, fixed_abs, tag = 'smem constant byte address 0x4 - core index']
  #allocation1 [shape = 'u32[144,128]{1,0:T(1,128)}', space=vmem, size = 0x12000, scoped, tag = 'internal scratch']
  %s0 = inlined_call_operand.hbm [shape: f32[32,512], index: 0, kind: input, shape index: {}]
  %s1 = inlined_call_operand.hbm [shape: f32[2,32,32], index: 1, kind: input, shape index: {}]
  %s2 = inlined_call_operand.vmem [shape: f32[2,4,32,8], index: 2, kind: output, shape index: {}]
  %s3 = sld [smem:[#allocation0]]
  $region49: #{tpu_custom_call.1} parent=0
    _
  %s5 = ssub.s32 1, %s3
  %s6 = scalar_select 0, %s5, %s3
  $region1: #{tpu_custom_call.1} parent=0
    #allocation2 [shape = 'u8[65536]{0}', space=vmem, size = 0x10000, scoped, tag = 'input window, operand 0, single buffered']
    #allocation3 [shape = 's32[2]{0}', space=sflag, size = 0x8, scoped, tag = 'scoped memory for tpu_custom_call.1']
    #allocation4 [shape = 'u8[32768]{0}', space=vmem, size = 0x8000, scoped, tag = 'input window, operand 1']
    #allocation5 [shape = 's32[2]{0}', space=sflag, size = 0x8, scoped, tag = 'scoped memory for tpu_custom_call.1']
    %7 = vsyncpa [#allocation3], 0
    %8 = vsyncpa [#allocation5], 0
    %s9 = scalar_lea.sflag [#allocation5], 1
    %10 = vsyncpa %s9, 0
    loop: start=0, step=1, limit=4
    $region2: #{tpu_custom_call.1} parent=1 // loop_pre_header
      _
    $region3: #{tpu_custom_call.1} parent=1 // loop_header
      %s12 = sphi 0, %s16
      %p13 = scmp.ge.s32.totalorder %s12, 4
      %s19 = sphi 0, %s31
      %s20 = sphi 0, %s27
      %s21 = sphi 0, %s19
      %s22 = sphi 0, %s20
      %s23 = sphi 0, %s21
      %s24 = sphi 0, %s22
      %s32 = sphi 0, %s32
      %s34 = sphi 0, %s32
      %s35 = sphi 0, %s34
      %s49 = sphi 0, %s35
      %s57 = sphi 0, %s59
      %s60 = sphi 0, %s57
      %s61 = sphi 0, %s60
      %s77 = sphi 0, %s61
      %s85 = sphi 0, %s87
      %s88 = sphi 0, %s85
      %s89 = sphi 0, %s88
      %s105 = sphi 0, %s89
    $region4: #{tpu_custom_call.1} parent=1 // loop_header_branch
      %15 = sbr.rel (%p13) target = $region8
    $region5: #{tpu_custom_call.1} parent=1 // loop_body
      %s17 = ssub.s32 %s12, 1
      %s18 = ssub.s32 %s12, 2
      %s25 = sadd.s32 1, %s20
      %p26 = scmp.ge.s32.totalorder %s25, 1
      %s27 = scalar_select %p26, 0, %s25
      %s28 = sadd.s32 1, %s19
      %s29 = scalar_select %p26, %s28, %s19
      %p30 = scmp.ge.s32.totalorder %s29, 2
      %s31 = scalar_select %p30, 0, %s29
      %s33 = sadd.s32 %s32, 1
      %p36 = scmp.eq.s32.totalorder %s12, 1
      %p37 = scmp.ne.s32.totalorder %s32, %s34
      %p38 = scmp.eq.s32.totalorder %s12, 0
      %p39 = por %p37, %p38
      %p40 = scmp.ne.s32.totalorder %s32, %s34
      %p41 = scmp.eq.s32.totalorder %s17, 1
      %p42 = por %p40, %p41
      %p43 = scmp.ne.s32.totalorder %s34, %s35
      %p44 = scmp.eq.s32.totalorder %s17, 0
      %p45 = por %p43, %p44
      %p46 = scmp.ne.s32.totalorder %s34, %s35
      %p47 = scmp.eq.s32.totalorder %s18, 1
      %p48 = por %p46, %p47
      %p50 = scmp.ne.s32.totalorder %s35, %s49
      %p51 = scmp.eq.s32.totalorder %s18, 0
      %p52 = por %p50, %p51
      %s53 = ssub.s32 %s19, %s31
      %s54 = ssub.s32 %s20, %s27
      %s55 = sor.u32 %s53, %s54
      %p56 = scmp.eq.s32.totalorder %s55, 0
      %s58 = sadd.s32 %s57, 1
      %s59 = scalar_select %p56, %s57, %s58
      %p62 = pneg %p56
      %p63 = scmp.eq.s32.totalorder %s12, 1
      %p64 = por %p62, %p63
      %p65 = scmp.ne.s32.totalorder %s57, %s60
      %p66 = scmp.eq.s32.totalorder %s12, 0
      %p67 = por %p65, %p66
      %p68 = scmp.ne.s32.totalorder %s57, %s60
      %p69 = scmp.eq.s32.totalorder %s17, 1
      %p70 = por %p68, %p69
      %p71 = scmp.ne.s32.totalorder %s60, %s61
      %p72 = scmp.eq.s32.totalorder %s17, 0
      %p73 = por %p71, %p72
      %p74 = scmp.ne.s32.totalorder %s60, %s61
      %p75 = scmp.eq.s32.totalorder %s18, 1
      %p76 = por %p74, %p75
      %p78 = scmp.ne.s32.totalorder %s61, %s77
      %p79 = scmp.eq.s32.totalorder %s18, 0
      %p80 = por %p78, %p79
      %s81 = ssub.s32 %s19, %s31
      %s82 = ssub.s32 %s20, %s27
      %s83 = sor.u32 %s81, %s82
      %p84 = scmp.eq.s32.totalorder %s83, 0
      %s86 = sadd.s32 %s85, 1
      %s87 = scalar_select %p84, %s85, %s86
      %p90 = pneg %p84
      %p91 = scmp.eq.s32.totalorder %s12, 1
      %p92 = por %p90, %p91
      %p93 = scmp.ne.s32.totalorder %s85, %s88
      %p94 = scmp.eq.s32.totalorder %s12, 0
      %p95 = por %p93, %p94
      %p96 = scmp.ne.s32.totalorder %s85, %s88
      %p97 = scmp.eq.s32.totalorder %s17, 1
      %p98 = por %p96, %p97
      %p99 = scmp.ne.s32.totalorder %s88, %s89
      %p100 = scmp.eq.s32.totalorder %s17, 0
      %p101 = por %p99, %p100
      %p102 = scmp.ne.s32.totalorder %s88, %s89
      %p103 = scmp.eq.s32.totalorder %s18, 1
      %p104 = por %p102, %p103
      %p106 = scmp.ne.s32.totalorder %s89, %s105
      %p107 = scmp.eq.s32.totalorder %s18, 0
      %p108 = por %p106, %p107
      %p109 = scmp.le.s32.totalorder 1, %s12
      %p110 = scmp.lt.s32.totalorder %s12, 3
      %p111 = pnand %p109, %p110
      %p112 = pneg %p111
      // Predicated region
      $region9: #{tpu_custom_call.1} parent=5 // pred_check
        _
      $region10: #{tpu_custom_call.1} parent=5 // pred_check_branch
        %114 = sbr.rel (%p111) target = $region12
      $region11: #{tpu_custom_call.1} parent=5 // pred_region
        %s115 = ssub.s32 %s12, 1
        // Predicated region
        $region13: #{tpu_custom_call.1} parent=11 // pred_check
          %p116 = pneg %p45
        $region14: #{tpu_custom_call.1} parent=11 // pred_check_branch
          %118 = sbr.rel (%p116) target = $region16
        $region15: #{tpu_custom_call.1} parent=11 // pred_region
          %s120 = ssub.s32 2048, 2048
          %121 = vsyncadd [#allocation3], %s120
          %s122 = sshll.u32 [#allocation2], 4
          %s123 = int_to_ptr.vmem [resolvable:$true] %s122
          %128 = dma.hbm_to_vmem [thread:$0]  %s0, 2048, %s123, [#allocation3], 512, 512, 32
        $region16: #{tpu_custom_call.1} parent=11 // pred_fallthru
          _
      $region12: #{tpu_custom_call.1} parent=5 // pred_fallthru
        _
      %p129 = scmp.lt.s32.totalorder %s12, 2
      // Predicated region
      $region17: #{tpu_custom_call.1} parent=5 // pred_check
        %p130 = pneg %p129
      $region18: #{tpu_custom_call.1} parent=5 // pred_check_branch
        %132 = sbr.rel (%p130) target = $region20
      $region19: #{tpu_custom_call.1} parent=5 // pred_region
        // Predicated region
        $region21: #{tpu_custom_call.1} parent=19 // pred_check
          %p133 = pneg %p67
        $region22: #{tpu_custom_call.1} parent=19 // pred_check_branch
          %135 = sbr.rel (%p133) target = $region24
        $region23: #{tpu_custom_call.1} parent=19 // pred_region
          %s136 = sand.u32 %s57, 1
          %s137 = scalar_lea.sflag [#allocation5], %s136
          %s138 = sand.u32 %s57, 1
          %s139 = smul.addr %s138, 32
          %s140 = scalar_lea.vmem [#allocation4], %s139
          %s141 = smul.u32 4, %s20
          %s143 = ssub.s32 512, 512
          %144 = vsyncadd %s137, %s143
          %s145 = smul.addr %s19, 4
          %s146 = sadd.s32 %s141, %s145
          %s147 = smul.addr %s146, 128
          %s148 = scalar_lea.hbm %s1, %s147
          %s149 = sshll.u32 %s140, 4
          %s150 = int_to_ptr.vmem [resolvable:$true] %s149
          %155 = dma.hbm_to_vmem [thread:$0]  %s148, 512, %s150, %s137, 128, 128, 8
        $region24: #{tpu_custom_call.1} parent=19 // pred_fallthru
          _
      $region20: #{tpu_custom_call.1} parent=5 // pred_fallthru
        _
      %p156 = scmp.le.s32.totalorder 1, %s12
      %p157 = scmp.lt.s32.totalorder %s12, 3
      %p158 = pnand %p156, %p157
      %p159 = pneg %p158
      // Predicated region
      $region25: #{tpu_custom_call.1} parent=5 // pred_check
        _
      $region26: #{tpu_custom_call.1} parent=5 // pred_check_branch
        %161 = sbr.rel (%p158) target = $region28
      $region27: #{tpu_custom_call.1} parent=5 // pred_region
        %s162 = ssub.s32 %s12, 1
        // Predicated region
        $region29: #{tpu_custom_call.1} parent=27 // pred_check
          %p163 = pneg %p45
        $region30: #{tpu_custom_call.1} parent=27 // pred_check_branch
          %165 = sbr.rel (%p163) target = $region32
        $region31: #{tpu_custom_call.1} parent=27 // pred_region
          %166 = dma.done [#allocation3], 2048
        $region32: #{tpu_custom_call.1} parent=27 // pred_fallthru
          _
        %s167 = sand.u32 %s60, 1
        %s168 = scalar_lea.sflag [#allocation5], %s167
        %s169 = sand.u32 %s60, 1
        %s170 = smul.addr %s169, 32
        %s171 = scalar_lea.vmem [#allocation4], %s170
        // Predicated region
        $region33: #{tpu_custom_call.1} parent=27 // pred_check
          %p172 = pneg %p73
        $region34: #{tpu_custom_call.1} parent=27 // pred_check_branch
          %174 = sbr.rel (%p172) target = $region36
        $region35: #{tpu_custom_call.1} parent=27 // pred_region
          %175 = dma.done %s168, 512
        $region36: #{tpu_custom_call.1} parent=27 // pred_fallthru
          _
        %p176 = pneg %p45
        %p177 = pneg %p42
        %s178 = sand.u32 %s60, 1
        %s179 = scalar_lea.sflag [#allocation5], %s178
        %s180 = sand.u32 %s60, 1
        %s181 = smul.addr %s180, 32
        %s182 = scalar_lea.vmem [#allocation4], %s181
        %p183 = pneg %p73
        %p184 = pneg %p70
        %p185 = pneg %p101
        %p186 = pneg %p98
        %s187 = smul.u32 4, %s22
        %p188 = scmp.lt.s32.totalorder %s21, 1
        %s189 = scalar_select %p188, %s21, 1
        %p190 = scmp.lt.s32.totalorder %s187, 3
        %s191 = scalar_select %p190, %s187, 3
        %s192 = smul.addr %s189, 16
        %s193 = sadd.s32 %s191, %s192
        %s194 = smul.addr %s193, 8
        %s195 = scalar_lea.vmem %s2, %s194
        %s196 = smul.u32 4, %s22
        %s197 = smul.u32 4, %s22
        %p198 = scmp.lt.s32.totalorder %s21, 1
        %s199 = scalar_select %p198, %s21, 1
        %p200 = scmp.lt.s32.totalorder %s197, 3
        %s201 = scalar_select %p200, %s197, 3
        %s202 = smul.addr %s199, 16
        %s203 = sadd.s32 %s201, %s202
        %s204 = smul.addr %s203, 8
        %s205 = scalar_lea.vmem %s2, %s204
        %s206 = smul.u32 4, %s22
        %v207 = vld [vmem:[#allocation2] sm:$0xff]
        %v208 = vld [vmem:[#allocation2 + $0x8] sm:$0xff]
        %v209 = vld [vmem:[#allocation2 + $0x10] sm:$0xff]
        %v210 = vld [vmem:[#allocation2 + $0x18] sm:$0xff]
        %v211 = vld [vmem:[#allocation2 + $0x20] sm:$0xff]
        %v212 = vld [vmem:[#allocation2 + $0x28] sm:$0xff]
        %v213 = vld [vmem:[#allocation2 + $0x30] sm:$0xff]
        %v214 = vld [vmem:[#allocation2 + $0x38] sm:$0xff]
        %v215 = vld [vmem:[#allocation2 + $0x40] sm:$0xff]
        %v216 = vld [vmem:[#allocation2 + $0x48] sm:$0xff]
        %v217 = vld [vmem:[#allocation2 + $0x50] sm:$0xff]
        %v218 = vld [vmem:[#allocation2 + $0x58] sm:$0xff]
        %v219 = vld [vmem:[#allocation2 + $0x60] sm:$0xff]
        %v220 = vld [vmem:[#allocation2 + $0x68] sm:$0xff]
        %v221 = vld [vmem:[#allocation2 + $0x70] sm:$0xff]
        %v222 = vld [vmem:[#allocation2 + $0x78] sm:$0xff]
        %v223 = vld [vmem:[%s171] sm:$0xff]
        %v224 = vld [vmem:[%s171 + $0x8] sm:$0xff]
        %v225 = vld [vmem:[%s171 + $0x10] sm:$0xff]
        %v226 = vld [vmem:[%s171 + $0x18] sm:$0xff]
        %vm227 = vcmask 261120
        %v229 = vsel %vm227, %v223, 0
        %v232 = vsel %vm227, %v224, 0
        %v235 = vsel %vm227, %v225, 0
        %v238 = vsel %vm227, %v226, 0
        %240 = vmatprep.subr.mxu0 0.0
        %241 = vmatpush1.msra.mxu0 0.0
        %242 = vmatprep.subr.mxu0 0.0
        %243 = vmatpush1.msra.mxu0 0.0
        %244 = vmatprep.subr.mxu0 0.0
        %245 = vmatpush1.msra.mxu0 0.0
        %246 = vmatprep.subr.mxu0 0.0
        %247 = vmatpush1.msra.mxu0 0.0
        %248 = vmatprep.subr.mxu0 0.0
        %249 = vmatpush1.msra.mxu0 0.0
        %250 = vmatprep.subr.mxu0 0.0
        %251 = vmatpush1.msra.mxu0 0.0
        %252 = vmatprep.subr.mxu0 0.0
        %253 = vmatpush1.msra.mxu0 0.0
        %254 = vmatprep.subr.mxu0 0.0
        %255 = vmatpush1.msra.mxu0 0.0
        %256 = vmatprep.subr.mxu0 0.0
        %257 = vmatpush1.msra.mxu0 0.0
        %258 = vmatprep.subr.mxu0 0.0
        %259 = vmatpush1.msra.mxu0 0.0
        %260 = vmatprep.subr.mxu0 0.0
        %261 = vmatpush1.msra.mxu0 0.0
        %262 = vmatprep.subr.mxu0 0.0
        %263 = vmatpush1.msra.mxu0 0.0
        %v264 = vand.u32 %v220, 4294901760
        %265 = vmatprep.subr.mxu0 %v264
        %v266 = vand.u32 %v219, 4294901760
        %267 = vmatpush1.msra.mxu0 %v266
        %v268 = vand.u32 %v216, 4294901760
        %269 = vmatprep.subr.mxu0 %v268
        %v270 = vand.u32 %v215, 4294901760
        %271 = vmatpush1.msra.mxu0 %v270
        %v272 = vand.u32 %v212, 4294901760
        %273 = vmatprep.subr.mxu0 %v272
        %v274 = vand.u32 %v211, 4294901760
        %275 = vmatpush1.msra.mxu0 %v274
        %v276 = vand.u32 %v208, 4294901760
        %277 = vmatprep.subr.mxu0 %v276
        %v278 = vand.u32 %v207, 4294901760
        %279 = vmatpush1.msra.mxu0 %v278
        %280 = vmatprep.subr.mxu0 0.0
        %281 = vmatpush2.msra.mxu0 0.0
        %282 = vmatprep.subr.mxu0 0.0
        %283 = vmatpush2.msra.mxu0 0.0
        %284 = vmatprep.subr.mxu0 0.0
        %285 = vmatpush2.msra.mxu0 0.0
        %286 = vmatprep.subr.mxu0 0.0
        %287 = vmatpush2.msra.mxu0 0.0
        %288 = vmatprep.subr.mxu0 0.0
        %289 = vmatpush2.msra.mxu0 0.0
        %290 = vmatprep.subr.mxu0 0.0
        %291 = vmatpush2.msra.mxu0 0.0
        %292 = vmatprep.subr.mxu0 0.0
        %293 = vmatpush2.msra.mxu0 0.0
        %294 = vmatprep.subr.mxu0 0.0
        %295 = vmatpush2.msra.mxu0 0.0
        %296 = vmatprep.subr.mxu0 0.0
        %297 = vmatpush2.msra.mxu0 0.0
        %298 = vmatprep.subr.mxu0 0.0
        %299 = vmatpush2.msra.mxu0 0.0
        %300 = vmatprep.subr.mxu0 0.0
        %301 = vmatpush2.msra.mxu0 0.0
        %302 = vmatprep.subr.mxu0 0.0
        %303 = vmatpush2.msra.mxu0 0.0
        %304 = vmatprep.subr.mxu0 0.0
        %305 = vmatpush2.msra.mxu0 0.0
        %306 = vmatprep.subr.mxu0 0.0
        %307 = vmatpush2.msra.mxu0 0.0
        %308 = vmatprep.subr.mxu0 0.0
        %309 = vmatpush2.msra.mxu0 0.0
        %310 = vmatprep.subr.mxu0 0.0
        %311 = vmatpush2.msra.mxu0 0.0
        %312 = vmatprep.mubr.f32.mxu0 0.0
        %v313 = vand.u32 %v229, 4294901760
        %v314 = vsub.f32 %v229, %v313
        %v315 = vand.u32 %v314, 4294901760
        %v316 = vsub.f32 %v314, %v315
        %v317 = vand.u32 %v316, 4294901760
        %318 = vmatmul.mubr.f32.gmra.mxu0 %v317
        %v319 = vpop.f32.mrf.mxu0
        %v320 = vadd.f32 0.0, %v319
        %v321 = vpop.f32.mrf.mxu0
        %v322 = vadd.f32 0.0, %v321
        %323 = vmatprep.mubr.f32.mxu0 0.0
        %v324 = vand.u32 %v232, 4294901760
        %v325 = vsub.f32 %v232, %v324
        %v326 = vand.u32 %v325, 4294901760
        %v327 = vsub.f32 %v325, %v326
        %v328 = vand.u32 %v327, 4294901760
        %329 = vmatmul.mubr.f32.gmra.mxu0 %v328
        %v330 = vpop.f32.mrf.mxu0
        %v331 = vadd.f32 0.0, %v330
        %v332 = vpop.f32.mrf.mxu0
        %v333 = vadd.f32 0.0, %v332
        %334 = vmatprep.mubr.f32.mxu0 0.0
        %v335 = vand.u32 %v235, 4294901760
        %v336 = vsub.f32 %v235, %v335
        %v337 = vand.u32 %v336, 4294901760
        %v338 = vsub.f32 %v336, %v337
        %v339 = vand.u32 %v338, 4294901760
        %340 = vmatmul.mubr.f32.gmra.mxu0 %v339
        %v341 = vpop.f32.mrf.mxu0
        %v342 = vadd.f32 0.0, %v341
        %v343 = vpop.f32.mrf.mxu0
        %v344 = vadd.f32 0.0, %v343
        %345 = vmatprep.mubr.f32.mxu0 0.0
        %v346 = vand.u32 %v238, 4294901760
        %v347 = vsub.f32 %v238, %v346
        %v348 = vand.u32 %v347, 4294901760
        %v349 = vsub.f32 %v347, %v348
        %v350 = vand.u32 %v349, 4294901760
        %351 = vmatmul.mubr.f32.gmra.mxu0 %v350
        %v352 = vpop.f32.mrf.mxu0
        %v353 = vadd.f32 0.0, %v352
        %v354 = vpop.f32.mrf.mxu0
        %v355 = vadd.f32 0.0, %v354
        %356 = vdwg.mxu0
        %357 = vmatprep.subr.mxu0 0.0
        %358 = vmatpush1.msra.mxu0 0.0
        %359 = vmatprep.subr.mxu0 0.0
        %360 = vmatpush1.msra.mxu0 0.0
        %361 = vmatprep.subr.mxu0 0.0
        %362 = vmatpush1.msra.mxu0 0.0
        %363 = vmatprep.subr.mxu0 0.0
        %364 = vmatpush1.msra.mxu0 0.0
        %365 = vmatprep.subr.mxu0 0.0
        %366 = vmatpush1.msra.mxu0 0.0
        %367 = vmatprep.subr.mxu0 0.0
        %368 = vmatpush1.msra.mxu0 0.0
        %369 = vmatprep.subr.mxu0 0.0
        %370 = vmatpush1.msra.mxu0 0.0
        %371 = vmatprep.subr.mxu0 0.0
        %372 = vmatpush1.msra.mxu0 0.0
        %373 = vmatprep.subr.mxu0 0.0
        %374 = vmatpush1.msra.mxu0 0.0
        %375 = vmatprep.subr.mxu0 0.0
        %376 = vmatpush1.msra.mxu0 0.0
        %377 = vmatprep.subr.mxu0 0.0
        %378 = vmatpush1.msra.mxu0 0.0
        %379 = vmatprep.subr.mxu0 0.0
        %380 = vmatpush1.msra.mxu0 0.0
        %v381 = vand.u32 %v220, 4294901760
        %v382 = vsub.f32 %v220, %v381
        %v383 = vand.u32 %v382, 4294901760
        %v384 = vsub.f32 %v382, %v383
        %v385 = vand.u32 %v384, 4294901760
        %386 = vmatprep.subr.mxu0 %v385
        %v387 = vand.u32 %v219, 4294901760
        %v388 = vsub.f32 %v219, %v387
        %v389 = vand.u32 %v388, 4294901760
        %v390 = vsub.f32 %v388, %v389
        %v391 = vand.u32 %v390, 4294901760
        %392 = vmatpush1.msra.mxu0 %v391
        %v393 = vand.u32 %v216, 4294901760
        %v394 = vsub.f32 %v216, %v393
        %v395 = vand.u32 %v394, 4294901760
        %v396 = vsub.f32 %v394, %v395
        %v397 = vand.u32 %v396, 4294901760
        %398 = vmatprep.subr.mxu0 %v397
        %v399 = vand.u32 %v215, 4294901760
        %v400 = vsub.f32 %v215, %v399
        %v401 = vand.u32 %v400, 4294901760
        %v402 = vsub.f32 %v400, %v401
        %v403 = vand.u32 %v402, 4294901760
        %404 = vmatpush1.msra.mxu0 %v403
        %v405 = vand.u32 %v212, 4294901760
        %v406 = vsub.f32 %v212, %v405
        %v407 = vand.u32 %v406, 4294901760
        %v408 = vsub.f32 %v406, %v407
        %v409 = vand.u32 %v408, 4294901760
        %410 = vmatprep.subr.mxu0 %v409
        %v411 = vand.u32 %v211, 4294901760
        %v412 = vsub.f32 %v211, %v411
        %v413 = vand.u32 %v412, 4294901760
        %v414 = vsub.f32 %v412, %v413
        %v415 = vand.u32 %v414, 4294901760
        %416 = vmatpush1.msra.mxu0 %v415
        %v417 = vand.u32 %v208, 4294901760
        %v418 = vsub.f32 %v208, %v417
        %v419 = vand.u32 %v418, 4294901760
        %v420 = vsub.f32 %v418, %v419
        %v421 = vand.u32 %v420, 4294901760
        %422 = vmatprep.subr.mxu0 %v421
        %v423 = vand.u32 %v207, 4294901760
        %v424 = vsub.f32 %v207, %v423
        %v425 = vand.u32 %v424, 4294901760
        %v426 = vsub.f32 %v424, %v425
        %v427 = vand.u32 %v426, 4294901760
        %428 = vmatpush1.msra.mxu0 %v427
        %429 = vmatprep.subr.mxu0 0.0
        %430 = vmatpush2.msra.mxu0 0.0
        %431 = vmatprep.subr.mxu0 0.0
        %432 = vmatpush2.msra.mxu0 0.0
        %433 = vmatprep.subr.mxu0 0.0
        %434 = vmatpush2.msra.mxu0 0.0
        %435 = vmatprep.subr.mxu0 0.0
        %436 = vmatpush2.msra.mxu0 0.0
        %437 = vmatprep.subr.mxu0 0.0
        %438 = vmatpush2.msra.mxu0 0.0
        %439 = vmatprep.subr.mxu0 0.0
        %440 = vmatpush2.msra.mxu0 0.0
        %441 = vmatprep.subr.mxu0 0.0
        %442 = vmatpush2.msra.mxu0 0.0
        %443 = vmatprep.subr.mxu0 0.0
        %444 = vmatpush2.msra.mxu0 0.0
        %445 = vmatprep.subr.mxu0 0.0
        %446 = vmatpush2.msra.mxu0 0.0
        %447 = vmatprep.subr.mxu0 0.0
        %448 = vmatpush2.msra.mxu0 0.0
        %449 = vmatprep.subr.mxu0 0.0
        %450 = vmatpush2.msra.mxu0 0.0
        %451 = vmatprep.subr.mxu0 0.0
        %452 = vmatpush2.msra.mxu0 0.0
        %453 = vmatprep.subr.mxu0 0.0
        %454 = vmatpush2.msra.mxu0 0.0
        %455 = vmatprep.subr.mxu0 0.0
        %456 = vmatpush2.msra.mxu0 0.0
        %457 = vmatprep.subr.mxu0 0.0
        %458 = vmatpush2.msra.mxu0 0.0
        %459 = vmatprep.subr.mxu0 0.0
        %460 = vmatpush2.msra.mxu0 0.0
        %461 = vmatprep.mubr.f32.mxu0 0.0
        %v462 = vand.u32 %v229, 4294901760
        %463 = vmatmul.mubr.f32.gmra.mxu0 %v462
        %v464 = vpop.f32.mrf.mxu0
        %v465 = vadd.f32 %v320, %v464
        %v466 = vpop.f32.mrf.mxu0
        %v467 = vadd.f32 %v322, %v466
        %468 = vmatprep.mubr.f32.mxu0 0.0
        %v469 = vand.u32 %v232, 4294901760
        %470 = vmatmul.mubr.f32.gmra.mxu0 %v469
        %v471 = vpop.f32.mrf.mxu0
        %v472 = vadd.f32 %v331, %v471
        %v473 = vpop.f32.mrf.mxu0
        %v474 = vadd.f32 %v333, %v473
        %475 = vmatprep.mubr.f32.mxu0 0.0
        %v476 = vand.u32 %v235, 4294901760
        %477 = vmatmul.mubr.f32.gmra.mxu0 %v476
        %v478 = vpop.f32.mrf.mxu0
        %v479 = vadd.f32 %v342, %v478
        %v480 = vpop.f32.mrf.mxu0
        %v481 = vadd.f32 %v344, %v480
        %482 = vmatprep.mubr.f32.mxu0 0.0
        %v483 = vand.u32 %v238, 4294901760
        %484 = vmatmul.mubr.f32.gmra.mxu0 %v483
        %v485 = vpop.f32.mrf.mxu0
        %v486 = vadd.f32 %v353, %v485
        %v487 = vpop.f32.mrf.mxu0
        %v488 = vadd.f32 %v355, %v487
        %489 = vdwg.mxu0
        %490 = vmatprep.subr.mxu0 0.0
        %491 = vmatpush1.msra.mxu0 0.0
        %492 = vmatprep.subr.mxu0 0.0
        %493 = vmatpush1.msra.mxu0 0.0
        %494 = vmatprep.subr.mxu0 0.0
        %495 = vmatpush1.msra.mxu0 0.0
        %496 = vmatprep.subr.mxu0 0.0
        %497 = vmatpush1.msra.mxu0 0.0
        %498 = vmatprep.subr.mxu0 0.0
        %499 = vmatpush1.msra.mxu0 0.0
        %500 = vmatprep.subr.mxu0 0.0
        %501 = vmatpush1.msra.mxu0 0.0
        %502 = vmatprep.subr.mxu0 0.0
        %503 = vmatpush1.msra.mxu0 0.0
        %504 = vmatprep.subr.mxu0 0.0
        %505 = vmatpush1.msra.mxu0 0.0
        %506 = vmatprep.subr.mxu0 0.0
        %507 = vmatpush1.msra.mxu0 0.0
        %508 = vmatprep.subr.mxu0 0.0
        %509 = vmatpush1.msra.mxu0 0.0
        %510 = vmatprep.subr.mxu0 0.0
        %511 = vmatpush1.msra.mxu0 0.0
        %512 = vmatprep.subr.mxu0 0.0
        %513 = vmatpush1.msra.mxu0 0.0
        %v514 = vand.u32 %v220, 4294901760
        %v515 = vsub.f32 %v220, %v514
        %516 = vmatprep.subr.mxu0 %v515
        %v517 = vand.u32 %v219, 4294901760
        %v518 = vsub.f32 %v219, %v517
        %519 = vmatpush1.msra.mxu0 %v518
        %v520 = vand.u32 %v216, 4294901760
        %v521 = vsub.f32 %v216, %v520
        %522 = vmatprep.subr.mxu0 %v521
        %v523 = vand.u32 %v215, 4294901760
        %v524 = vsub.f32 %v215, %v523
        %525 = vmatpush1.msra.mxu0 %v524
        %v526 = vand.u32 %v212, 4294901760
        %v527 = vsub.f32 %v212, %v526
        %528 = vmatprep.subr.mxu0 %v527
        %v529 = vand.u32 %v211, 4294901760
        %v530 = vsub.f32 %v211, %v529
        %531 = vmatpush1.msra.mxu0 %v530
        %v532 = vand.u32 %v208, 4294901760
        %v533 = vsub.f32 %v208, %v532
        %534 = vmatprep.subr.mxu0 %v533
        %v535 = vand.u32 %v207, 4294901760
        %v536 = vsub.f32 %v207, %v535
        %537 = vmatpush1.msra.mxu0 %v536
        %538 = vmatprep.subr.mxu0 0.0
        %539 = vmatpush2.msra.mxu0 0.0
        %540 = vmatprep.subr.mxu0 0.0
        %541 = vmatpush2.msra.mxu0 0.0
        %542 = vmatprep.subr.mxu0 0.0
        %543 = vmatpush2.msra.mxu0 0.0
        %544 = vmatprep.subr.mxu0 0.0
        %545 = vmatpush2.msra.mxu0 0.0
        %546 = vmatprep.subr.mxu0 0.0
        %547 = vmatpush2.msra.mxu0 0.0
        %548 = vmatprep.subr.mxu0 0.0
        %549 = vmatpush2.msra.mxu0 0.0
        %550 = vmatprep.subr.mxu0 0.0
        %551 = vmatpush2.msra.mxu0 0.0
        %552 = vmatprep.subr.mxu0 0.0
        %553 = vmatpush2.msra.mxu0 0.0
        %554 = vmatprep.subr.mxu0 0.0
        %555 = vmatpush2.msra.mxu0 0.0
        %556 = vmatprep.subr.mxu0 0.0
        %557 = vmatpush2.msra.mxu0 0.0
        %558 = vmatprep.subr.mxu0 0.0
        %559 = vmatpush2.msra.mxu0 0.0
        %560 = vmatprep.subr.mxu0 0.0
        %561 = vmatpush2.msra.mxu0 0.0
        %562 = vmatprep.subr.mxu0 0.0
        %563 = vmatpush2.msra.mxu0 0.0
        %564 = vmatprep.subr.mxu0 0.0
        %565 = vmatpush2.msra.mxu0 0.0
        %566 = vmatprep.subr.mxu0 0.0
        %567 = vmatpush2.msra.mxu0 0.0
        %568 = vmatprep.subr.mxu0 0.0
        %569 = vmatpush2.msra.mxu0 0.0
        %570 = vmatprep.mubr.f32.mxu0 0.0
        %v571 = vand.u32 %v229, 4294901760
        %v572 = vsub.f32 %v229, %v571
        %573 = vmatmul.mubr.f32.gmra.mxu0 %v572
        %v574 = vpop.f32.mrf.mxu0
        %v575 = vadd.f32 %v465, %v574
        %v576 = vpop.f32.mrf.mxu0
        %v577 = vadd.f32 %v467, %v576
        %578 = vmatprep.mubr.f32.mxu0 0.0
        %v579 = vand.u32 %v232, 4294901760
        %v580 = vsub.f32 %v232, %v579
        %581 = vmatmul.mubr.f32.gmra.mxu0 %v580
        %v582 = vpop.f32.mrf.mxu0
        %v583 = vadd.f32 %v472, %v582
        %v584 = vpop.f32.mrf.mxu0
        %v585 = vadd.f32 %v474, %v584
        %586 = vmatprep.mubr.f32.mxu0 0.0
        %v587 = vand.u32 %v235, 4294901760
        %v588 = vsub.f32 %v235, %v587
        %589 = vmatmul.mubr.f32.gmra.mxu0 %v588
        %v590 = vpop.f32.mrf.mxu0
        %v591 = vadd.f32 %v479, %v590
        %v592 = vpop.f32.mrf.mxu0
        %v593 = vadd.f32 %v481, %v592
        %594 = vmatprep.mubr.f32.mxu0 0.0
        %v595 = vand.u32 %v238, 4294901760
        %v596 = vsub.f32 %v238, %v595
        %597 = vmatmul.mubr.f32.gmra.mxu0 %v596
        %v598 = vpop.f32.mrf.mxu0
        %v599 = vadd.f32 %v486, %v598
        %v600 = vpop.f32.mrf.mxu0
        %v601 = vadd.f32 %v488, %v600
        %602 = vdwg.mxu0
        %603 = vmatprep.subr.mxu0 0.0
        %604 = vmatpush1.msra.mxu0 0.0
        %605 = vmatprep.subr.mxu0 0.0
        %606 = vmatpush1.msra.mxu0 0.0
        %607 = vmatprep.subr.mxu0 0.0
        %608 = vmatpush1.msra.mxu0 0.0
        %609 = vmatprep.subr.mxu0 0.0
        %610 = vmatpush1.msra.mxu0 0.0
        %611 = vmatprep.subr.mxu0 0.0
        %612 = vmatpush1.msra.mxu0 0.0
        %613 = vmatprep.subr.mxu0 0.0
        %614 = vmatpush1.msra.mxu0 0.0
        %615 = vmatprep.subr.mxu0 0.0
        %616 = vmatpush1.msra.mxu0 0.0
        %617 = vmatprep.subr.mxu0 0.0
        %618 = vmatpush1.msra.mxu0 0.0
        %619 = vmatprep.subr.mxu0 0.0
        %620 = vmatpush1.msra.mxu0 0.0
        %621 = vmatprep.subr.mxu0 0.0
        %622 = vmatpush1.msra.mxu0 0.0
        %623 = vmatprep.subr.mxu0 0.0
        %624 = vmatpush1.msra.mxu0 0.0
        %625 = vmatprep.subr.mxu0 0.0
        %626 = vmatpush1.msra.mxu0 0.0
        %v627 = vand.u32 %v220, 4294901760
        %628 = vmatprep.subr.mxu0 %v627
        %v629 = vand.u32 %v219, 4294901760
        %630 = vmatpush1.msra.mxu0 %v629
        %v631 = vand.u32 %v216, 4294901760
        %632 = vmatprep.subr.mxu0 %v631
        %v633 = vand.u32 %v215, 4294901760
        %634 = vmatpush1.msra.mxu0 %v633
        %v635 = vand.u32 %v212, 4294901760
        %636 = vmatprep.subr.mxu0 %v635
        %v637 = vand.u32 %v211, 4294901760
        %638 = vmatpush1.msra.mxu0 %v637
        %v639 = vand.u32 %v208, 4294901760
        %640 = vmatprep.subr.mxu0 %v639
        %v641 = vand.u32 %v207, 4294901760
        %642 = vmatpush1.msra.mxu0 %v641
        %643 = vmatprep.subr.mxu0 0.0
        %644 = vmatpush2.msra.mxu0 0.0
        %645 = vmatprep.subr.mxu0 0.0
        %646 = vmatpush2.msra.mxu0 0.0
        %647 = vmatprep.subr.mxu0 0.0
        %648 = vmatpush2.msra.mxu0 0.0
        %649 = vmatprep.subr.mxu0 0.0
        %650 = vmatpush2.msra.mxu0 0.0
        %651 = vmatprep.subr.mxu0 0.0
        %652 = vmatpush2.msra.mxu0 0.0
        %653 = vmatprep.subr.mxu0 0.0
        %654 = vmatpush2.msra.mxu0 0.0
        %655 = vmatprep.subr.mxu0 0.0
        %656 = vmatpush2.msra.mxu0 0.0
        %657 = vmatprep.subr.mxu0 0.0
        %658 = vmatpush2.msra.mxu0 0.0
        %659 = vmatprep.subr.mxu0 0.0
        %660 = vmatpush2.msra.mxu0 0.0
        %661 = vmatprep.subr.mxu0 0.0
        %662 = vmatpush2.msra.mxu0 0.0
        %663 = vmatprep.subr.mxu0 0.0
        %664 = vmatpush2.msra.mxu0 0.0
        %665 = vmatprep.subr.mxu0 0.0
        %666 = vmatpush2.msra.mxu0 0.0
        %667 = vmatprep.subr.mxu0 0.0
        %668 = vmatpush2.msra.mxu0 0.0
        %669 = vmatprep.subr.mxu0 0.0
        %670 = vmatpush2.msra.mxu0 0.0
        %671 = vmatprep.subr.mxu0 0.0
        %672 = vmatpush2.msra.mxu0 0.0
        %673 = vmatprep.subr.mxu0 0.0
        %674 = vmatpush2.msra.mxu0 0.0
        %675 = vmatprep.mubr.f32.mxu0 0.0
        %v676 = vand.u32 %v229, 4294901760
        %v677 = vsub.f32 %v229, %v676
        %v678 = vand.u32 %v677, 4294901760
        %679 = vmatmul.mubr.f32.gmra.mxu0 %v678
        %v680 = vpop.f32.mrf.mxu0
        %v681 = vadd.f32 %v575, %v680
        %v682 = vpop.f32.mrf.mxu0
        %v683 = vadd.f32 %v577, %v682
        %684 = vmatprep.mubr.f32.mxu0 0.0
        %v685 = vand.u32 %v232, 4294901760
        %v686 = vsub.f32 %v232, %v685
        %v687 = vand.u32 %v686, 4294901760
        %688 = vmatmul.mubr.f32.gmra.mxu0 %v687
        %v689 = vpop.f32.mrf.mxu0
        %v690 = vadd.f32 %v583, %v689
        %v691 = vpop.f32.mrf.mxu0
        %v692 = vadd.f32 %v585, %v691
        %693 = vmatprep.mubr.f32.mxu0 0.0
        %v694 = vand.u32 %v235, 4294901760
        %v695 = vsub.f32 %v235, %v694
        %v696 = vand.u32 %v695, 4294901760
        %697 = vmatmul.mubr.f32.gmra.mxu0 %v696
        %v698 = vpop.f32.mrf.mxu0
        %v699 = vadd.f32 %v591, %v698
        %v700 = vpop.f32.mrf.mxu0
        %v701 = vadd.f32 %v593, %v700
        %702 = vmatprep.mubr.f32.mxu0 0.0
        %v703 = vand.u32 %v238, 4294901760
        %v704 = vsub.f32 %v238, %v703
        %v705 = vand.u32 %v704, 4294901760
        %706 = vmatmul.mubr.f32.gmra.mxu0 %v705
        %v707 = vpop.f32.mrf.mxu0
        %v708 = vadd.f32 %v599, %v707
        %v709 = vpop.f32.mrf.mxu0
        %v710 = vadd.f32 %v601, %v709
        %711 = vdwg.mxu0
        %712 = vmatprep.subr.mxu0 0.0
        %713 = vmatpush1.msra.mxu0 0.0
        %714 = vmatprep.subr.mxu0 0.0
        %715 = vmatpush1.msra.mxu0 0.0
        %716 = vmatprep.subr.mxu0 0.0
        %717 = vmatpush1.msra.mxu0 0.0
        %718 = vmatprep.subr.mxu0 0.0
        %719 = vmatpush1.msra.mxu0 0.0
        %720 = vmatprep.subr.mxu0 0.0
        %721 = vmatpush1.msra.mxu0 0.0
        %722 = vmatprep.subr.mxu0 0.0
        %723 = vmatpush1.msra.mxu0 0.0
        %724 = vmatprep.subr.mxu0 0.0
        %725 = vmatpush1.msra.mxu0 0.0
        %726 = vmatprep.subr.mxu0 0.0
        %727 = vmatpush1.msra.mxu0 0.0
        %728 = vmatprep.subr.mxu0 0.0
        %729 = vmatpush1.msra.mxu0 0.0
        %730 = vmatprep.subr.mxu0 0.0
        %731 = vmatpush1.msra.mxu0 0.0
        %732 = vmatprep.subr.mxu0 0.0
        %733 = vmatpush1.msra.mxu0 0.0
        %734 = vmatprep.subr.mxu0 0.0
        %735 = vmatpush1.msra.mxu0 0.0
        %v736 = vand.u32 %v220, 4294901760
        %v737 = vsub.f32 %v220, %v736
        %v738 = vand.u32 %v737, 4294901760
        %739 = vmatprep.subr.mxu0 %v738
        %v740 = vand.u32 %v219, 4294901760
        %v741 = vsub.f32 %v219, %v740
        %v742 = vand.u32 %v741, 4294901760
        %743 = vmatpush1.msra.mxu0 %v742
        %v744 = vand.u32 %v216, 4294901760
        %v745 = vsub.f32 %v216, %v744
        %v746 = vand.u32 %v745, 4294901760
        %747 = vmatprep.subr.mxu0 %v746
        %v748 = vand.u32 %v215, 4294901760
        %v749 = vsub.f32 %v215, %v748
        %v750 = vand.u32 %v749, 4294901760
        %751 = vmatpush1.msra.mxu0 %v750
        %v752 = vand.u32 %v212, 4294901760
        %v753 = vsub.f32 %v212, %v752
        %v754 = vand.u32 %v753, 4294901760
        %755 = vmatprep.subr.mxu0 %v754
        %v756 = vand.u32 %v211, 4294901760
        %v757 = vsub.f32 %v211, %v756
        %v758 = vand.u32 %v757, 4294901760
        %759 = vmatpush1.msra.mxu0 %v758
        %v760 = vand.u32 %v208, 4294901760
        %v761 = vsub.f32 %v208, %v760
        %v762 = vand.u32 %v761, 4294901760
        %763 = vmatprep.subr.mxu0 %v762
        %v764 = vand.u32 %v207, 4294901760
        %v765 = vsub.f32 %v207, %v764
        %v766 = vand.u32 %v765, 4294901760
        %767 = vmatpush1.msra.mxu0 %v766
        %768 = vmatprep.subr.mxu0 0.0
        %769 = vmatpush2.msra.mxu0 0.0
        %770 = vmatprep.subr.mxu0 0.0
        %771 = vmatpush2.msra.mxu0 0.0
        %772 = vmatprep.subr.mxu0 0.0
        %773 = vmatpush2.msra.mxu0 0.0
        %774 = vmatprep.subr.mxu0 0.0
        %775 = vmatpush2.msra.mxu0 0.0
        %776 = vmatprep.subr.mxu0 0.0
        %777 = vmatpush2.msra.mxu0 0.0
        %778 = vmatprep.subr.mxu0 0.0
        %779 = vmatpush2.msra.mxu0 0.0
        %780 = vmatprep.subr.mxu0 0.0
        %781 = vmatpush2.msra.mxu0 0.0
        %782 = vmatprep.subr.mxu0 0.0
        %783 = vmatpush2.msra.mxu0 0.0
        %784 = vmatprep.subr.mxu0 0.0
        %785 = vmatpush2.msra.mxu0 0.0
        %786 = vmatprep.subr.mxu0 0.0
        %787 = vmatpush2.msra.mxu0 0.0
        %788 = vmatprep.subr.mxu0 0.0
        %789 = vmatpush2.msra.mxu0 0.0
        %790 = vmatprep.subr.mxu0 0.0
        %791 = vmatpush2.msra.mxu0 0.0
        %792 = vmatprep.subr.mxu0 0.0
        %793 = vmatpush2.msra.mxu0 0.0
        %794 = vmatprep.subr.mxu0 0.0
        %795 = vmatpush2.msra.mxu0 0.0
        %796 = vmatprep.subr.mxu0 0.0
        %797 = vmatpush2.msra.mxu0 0.0
        %798 = vmatprep.subr.mxu0 0.0
        %799 = vmatpush2.msra.mxu0 0.0
        %800 = vmatprep.mubr.f32.mxu0 0.0
        %v801 = vand.u32 %v229, 4294901760
        %802 = vmatmul.mubr.f32.gmra.mxu0 %v801
        %v803 = vpop.f32.mrf.mxu0
        %v804 = vadd.f32 %v681, %v803
        %v805 = vpop.f32.mrf.mxu0
        %v806 = vadd.f32 %v683, %v805
        %807 = vmatprep.mubr.f32.mxu0 0.0
        %v808 = vand.u32 %v232, 4294901760
        %809 = vmatmul.mubr.f32.gmra.mxu0 %v808
        %v810 = vpop.f32.mrf.mxu0
        %v811 = vadd.f32 %v690, %v810
        %v812 = vpop.f32.mrf.mxu0
        %v813 = vadd.f32 %v692, %v812
        %814 = vmatprep.mubr.f32.mxu0 0.0
        %v815 = vand.u32 %v235, 4294901760
        %816 = vmatmul.mubr.f32.gmra.mxu0 %v815
        %v817 = vpop.f32.mrf.mxu0
        %v818 = vadd.f32 %v699, %v817
        %v819 = vpop.f32.mrf.mxu0
        %v820 = vadd.f32 %v701, %v819
        %821 = vmatprep.mubr.f32.mxu0 0.0
        %v822 = vand.u32 %v238, 4294901760
        %823 = vmatmul.mubr.f32.gmra.mxu0 %v822
        %v824 = vpop.f32.mrf.mxu0
        %v825 = vadd.f32 %v708, %v824
        %v826 = vpop.f32.mrf.mxu0
        %v827 = vadd.f32 %v710, %v826
        %828 = vdwg.mxu0
        %829 = vmatprep.subr.mxu0 0.0
        %830 = vmatpush1.msra.mxu0 0.0
        %831 = vmatprep.subr.mxu0 0.0
        %832 = vmatpush1.msra.mxu0 0.0
        %833 = vmatprep.subr.mxu0 0.0
        %834 = vmatpush1.msra.mxu0 0.0
        %835 = vmatprep.subr.mxu0 0.0
        %836 = vmatpush1.msra.mxu0 0.0
        %837 = vmatprep.subr.mxu0 0.0
        %838 = vmatpush1.msra.mxu0 0.0
        %839 = vmatprep.subr.mxu0 0.0
        %840 = vmatpush1.msra.mxu0 0.0
        %841 = vmatprep.subr.mxu0 0.0
        %842 = vmatpush1.msra.mxu0 0.0
        %843 = vmatprep.subr.mxu0 0.0
        %844 = vmatpush1.msra.mxu0 0.0
        %845 = vmatprep.subr.mxu0 0.0
        %846 = vmatpush1.msra.mxu0 0.0
        %847 = vmatprep.subr.mxu0 0.0
        %848 = vmatpush1.msra.mxu0 0.0
        %849 = vmatprep.subr.mxu0 0.0
        %850 = vmatpush1.msra.mxu0 0.0
        %851 = vmatprep.subr.mxu0 0.0
        %852 = vmatpush1.msra.mxu0 0.0
        %v853 = vand.u32 %v220, 4294901760
        %854 = vmatprep.subr.mxu0 %v853
        %v855 = vand.u32 %v219, 4294901760
        %856 = vmatpush1.msra.mxu0 %v855
        %v857 = vand.u32 %v216, 4294901760
        %858 = vmatprep.subr.mxu0 %v857
        %v859 = vand.u32 %v215, 4294901760
        %860 = vmatpush1.msra.mxu0 %v859
        %v861 = vand.u32 %v212, 4294901760
        %862 = vmatprep.subr.mxu0 %v861
        %v863 = vand.u32 %v211, 4294901760
        %864 = vmatpush1.msra.mxu0 %v863
        %v865 = vand.u32 %v208, 4294901760
        %866 = vmatprep.subr.mxu0 %v865
        %v867 = vand.u32 %v207, 4294901760
        %868 = vmatpush1.msra.mxu0 %v867
        %869 = vmatprep.subr.mxu0 0.0
        %870 = vmatpush2.msra.mxu0 0.0
        %871 = vmatprep.subr.mxu0 0.0
        %872 = vmatpush2.msra.mxu0 0.0
        %873 = vmatprep.subr.mxu0 0.0
        %874 = vmatpush2.msra.mxu0 0.0
        %875 = vmatprep.subr.mxu0 0.0
        %876 = vmatpush2.msra.mxu0 0.0
        %877 = vmatprep.subr.mxu0 0.0
        %878 = vmatpush2.msra.mxu0 0.0
        %879 = vmatprep.subr.mxu0 0.0
        %880 = vmatpush2.msra.mxu0 0.0
        %881 = vmatprep.subr.mxu0 0.0
        %882 = vmatpush2.msra.mxu0 0.0
        %883 = vmatprep.subr.mxu0 0.0
        %884 = vmatpush2.msra.mxu0 0.0
        %885 = vmatprep.subr.mxu0 0.0
        %886 = vmatpush2.msra.mxu0 0.0
        %887 = vmatprep.subr.mxu0 0.0
        %888 = vmatpush2.msra.mxu0 0.0
        %889 = vmatprep.subr.mxu0 0.0
        %890 = vmatpush2.msra.mxu0 0.0
        %891 = vmatprep.subr.mxu0 0.0
        %892 = vmatpush2.msra.mxu0 0.0
        %893 = vmatprep.subr.mxu0 0.0
        %894 = vmatpush2.msra.mxu0 0.0
        %895 = vmatprep.subr.mxu0 0.0
        %896 = vmatpush2.msra.mxu0 0.0
        %897 = vmatprep.subr.mxu0 0.0
        %898 = vmatpush2.msra.mxu0 0.0
        %899 = vmatprep.subr.mxu0 0.0
        %900 = vmatpush2.msra.mxu0 0.0
        %901 = vmatprep.mubr.f32.mxu0 0.0
        %v902 = vand.u32 %v229, 4294901760
        %903 = vmatmul.mubr.f32.gmra.mxu0 %v902
        %v904 = vpop.f32.mrf.mxu0
        %v905 = vadd.f32 %v804, %v904
        %v906 = vpop.f32.mrf.mxu0
        %v907 = vadd.f32 %v806, %v906
        %908 = vmatprep.mubr.f32.mxu0 0.0
        %v909 = vand.u32 %v232, 4294901760
        %910 = vmatmul.mubr.f32.gmra.mxu0 %v909
        %v911 = vpop.f32.mrf.mxu0
        %v912 = vadd.f32 %v811, %v911
        %v913 = vpop.f32.mrf.mxu0
        %v914 = vadd.f32 %v813, %v913
        %915 = vmatprep.mubr.f32.mxu0 0.0
        %v916 = vand.u32 %v235, 4294901760
        %917 = vmatmul.mubr.f32.gmra.mxu0 %v916
        %v918 = vpop.f32.mrf.mxu0
        %v919 = vadd.f32 %v818, %v918
        %v920 = vpop.f32.mrf.mxu0
        %v921 = vadd.f32 %v820, %v920
        %922 = vmatprep.mubr.f32.mxu0 0.0
        %v923 = vand.u32 %v238, 4294901760
        %924 = vmatmul.mubr.f32.gmra.mxu0 %v923
        %v925 = vpop.f32.mrf.mxu0
        %v926 = vadd.f32 %v825, %v925
        %v927 = vpop.f32.mrf.mxu0
        %v928 = vadd.f32 %v827, %v927
        %929 = vdwg.mxu0
        %930 = vmatprep.subr.mxu0 0.0
        %931 = vmatpush1.msra.mxu0 0.0
        %932 = vmatprep.subr.mxu0 0.0
        %933 = vmatpush1.msra.mxu0 0.0
        %934 = vmatprep.subr.mxu0 0.0
        %935 = vmatpush1.msra.mxu0 0.0
        %936 = vmatprep.subr.mxu0 0.0
        %937 = vmatpush1.msra.mxu0 0.0
        %938 = vmatprep.subr.mxu0 0.0
        %939 = vmatpush1.msra.mxu0 0.0
        %940 = vmatprep.subr.mxu0 0.0
        %941 = vmatpush1.msra.mxu0 0.0
        %942 = vmatprep.subr.mxu0 0.0
        %943 = vmatpush1.msra.mxu0 0.0
        %944 = vmatprep.subr.mxu0 0.0
        %945 = vmatpush1.msra.mxu0 0.0
        %946 = vmatprep.subr.mxu0 0.0
        %947 = vmatpush1.msra.mxu0 0.0
        %948 = vmatprep.subr.mxu0 0.0
        %949 = vmatpush1.msra.mxu0 0.0
        %950 = vmatprep.subr.mxu0 0.0
        %951 = vmatpush1.msra.mxu0 0.0
        %952 = vmatprep.subr.mxu0 0.0
        %953 = vmatpush1.msra.mxu0 0.0
        %v954 = vand.u32 %v222, 4294901760
        %955 = vmatprep.subr.mxu0 %v954
        %v956 = vand.u32 %v221, 4294901760
        %957 = vmatpush1.msra.mxu0 %v956
        %v958 = vand.u32 %v218, 4294901760
        %959 = vmatprep.subr.mxu0 %v958
        %v960 = vand.u32 %v217, 4294901760
        %961 = vmatpush1.msra.mxu0 %v960
        %v962 = vand.u32 %v214, 4294901760
        %963 = vmatprep.subr.mxu0 %v962
        %v964 = vand.u32 %v213, 4294901760
        %965 = vmatpush1.msra.mxu0 %v964
        %v966 = vand.u32 %v210, 4294901760
        %967 = vmatprep.subr.mxu0 %v966
        %v968 = vand.u32 %v209, 4294901760
        %969 = vmatpush1.msra.mxu0 %v968
        %970 = vmatprep.subr.mxu0 0.0
        %971 = vmatpush2.msra.mxu0 0.0
        %972 = vmatprep.subr.mxu0 0.0
        %973 = vmatpush2.msra.mxu0 0.0
        %974 = vmatprep.subr.mxu0 0.0
        %975 = vmatpush2.msra.mxu0 0.0
        %976 = vmatprep.subr.mxu0 0.0
        %977 = vmatpush2.msra.mxu0 0.0
        %978 = vmatprep.subr.mxu0 0.0
        %979 = vmatpush2.msra.mxu0 0.0
        %980 = vmatprep.subr.mxu0 0.0
        %981 = vmatpush2.msra.mxu0 0.0
        %982 = vmatprep.subr.mxu0 0.0
        %983 = vmatpush2.msra.mxu0 0.0
        %984 = vmatprep.subr.mxu0 0.0
        %985 = vmatpush2.msra.mxu0 0.0
        %986 = vmatprep.subr.mxu0 0.0
        %987 = vmatpush2.msra.mxu0 0.0
        %988 = vmatprep.subr.mxu0 0.0
        %989 = vmatpush2.msra.mxu0 0.0
        %990 = vmatprep.subr.mxu0 0.0
        %991 = vmatpush2.msra.mxu0 0.0
        %992 = vmatprep.subr.mxu0 0.0
        %993 = vmatpush2.msra.mxu0 0.0
        %994 = vmatprep.subr.mxu0 0.0
        %995 = vmatpush2.msra.mxu0 0.0
        %996 = vmatprep.subr.mxu0 0.0
        %997 = vmatpush2.msra.mxu0 0.0
        %998 = vmatprep.subr.mxu0 0.0
        %999 = vmatpush2.msra.mxu0 0.0
        %1000 = vmatprep.subr.mxu0 0.0
        %1001 = vmatpush2.msra.mxu0 0.0
        %1002 = vmatprep.mubr.f32.mxu0 0.0
        %v1003 = vand.u32 %v229, 4294901760
        %v1004 = vsub.f32 %v229, %v1003
        %v1005 = vand.u32 %v1004, 4294901760
        %v1006 = vsub.f32 %v1004, %v1005
        %v1007 = vand.u32 %v1006, 4294901760
        %1008 = vmatmul.mubr.f32.gmra.mxu0 %v1007
        %v1009 = vpop.f32.mrf.mxu0
        %v1010 = vadd.f32 0.0, %v1009
        %v1011 = vpop.f32.mrf.mxu0
        %v1012 = vadd.f32 0.0, %v1011
        %1013 = vmatprep.mubr.f32.mxu0 0.0
        %v1014 = vand.u32 %v232, 4294901760
        %v1015 = vsub.f32 %v232, %v1014
        %v1016 = vand.u32 %v1015, 4294901760
        %v1017 = vsub.f32 %v1015, %v1016
        %v1018 = vand.u32 %v1017, 4294901760
        %1019 = vmatmul.mubr.f32.gmra.mxu0 %v1018
        %v1020 = vpop.f32.mrf.mxu0
        %v1021 = vadd.f32 0.0, %v1020
        %v1022 = vpop.f32.mrf.mxu0
        %v1023 = vadd.f32 0.0, %v1022
        %1024 = vmatprep.mubr.f32.mxu0 0.0
        %v1025 = vand.u32 %v235, 4294901760
        %v1026 = vsub.f32 %v235, %v1025
        %v1027 = vand.u32 %v1026, 4294901760
        %v1028 = vsub.f32 %v1026, %v1027
        %v1029 = vand.u32 %v1028, 4294901760
        %1030 = vmatmul.mubr.f32.gmra.mxu0 %v1029
        %v1031 = vpop.f32.mrf.mxu0
        %v1032 = vadd.f32 0.0, %v1031
        %v1033 = vpop.f32.mrf.mxu0
        %v1034 = vadd.f32 0.0, %v1033
        %1035 = vmatprep.mubr.f32.mxu0 0.0
        %v1036 = vand.u32 %v238, 4294901760
        %v1037 = vsub.f32 %v238, %v1036
        %v1038 = vand.u32 %v1037, 4294901760
        %v1039 = vsub.f32 %v1037, %v1038
        %v1040 = vand.u32 %v1039, 4294901760
        %1041 = vmatmul.mubr.f32.gmra.mxu0 %v1040
        %v1042 = vpop.f32.mrf.mxu0
        %v1043 = vadd.f32 0.0, %v1042
        %v1044 = vpop.f32.mrf.mxu0
        %v1045 = vadd.f32 0.0, %v1044
        %1046 = vdwg.mxu0
        %1047 = vmatprep.subr.mxu0 0.0
        %1048 = vmatpush1.msra.mxu0 0.0
        %1049 = vmatprep.subr.mxu0 0.0
        %1050 = vmatpush1.msra.mxu0 0.0
        %1051 = vmatprep.subr.mxu0 0.0
        %1052 = vmatpush1.msra.mxu0 0.0
        %1053 = vmatprep.subr.mxu0 0.0
        %1054 = vmatpush1.msra.mxu0 0.0
        %1055 = vmatprep.subr.mxu0 0.0
        %1056 = vmatpush1.msra.mxu0 0.0
        %1057 = vmatprep.subr.mxu0 0.0
        %1058 = vmatpush1.msra.mxu0 0.0
        %1059 = vmatprep.subr.mxu0 0.0
        %1060 = vmatpush1.msra.mxu0 0.0
        %1061 = vmatprep.subr.mxu0 0.0
        %1062 = vmatpush1.msra.mxu0 0.0
        %1063 = vmatprep.subr.mxu0 0.0
        %1064 = vmatpush1.msra.mxu0 0.0
        %1065 = vmatprep.subr.mxu0 0.0
        %1066 = vmatpush1.msra.mxu0 0.0
        %1067 = vmatprep.subr.mxu0 0.0
        %1068 = vmatpush1.msra.mxu0 0.0
        %1069 = vmatprep.subr.mxu0 0.0
        %1070 = vmatpush1.msra.mxu0 0.0
        %v1071 = vand.u32 %v222, 4294901760
        %v1072 = vsub.f32 %v222, %v1071
        %v1073 = vand.u32 %v1072, 4294901760
        %v1074 = vsub.f32 %v1072, %v1073
        %v1075 = vand.u32 %v1074, 4294901760
        %1076 = vmatprep.subr.mxu0 %v1075
        %v1077 = vand.u32 %v221, 4294901760
        %v1078 = vsub.f32 %v221, %v1077
        %v1079 = vand.u32 %v1078, 4294901760
        %v1080 = vsub.f32 %v1078, %v1079
        %v1081 = vand.u32 %v1080, 4294901760
        %1082 = vmatpush1.msra.mxu0 %v1081
        %v1083 = vand.u32 %v218, 4294901760
        %v1084 = vsub.f32 %v218, %v1083
        %v1085 = vand.u32 %v1084, 4294901760
        %v1086 = vsub.f32 %v1084, %v1085
        %v1087 = vand.u32 %v1086, 4294901760
        %1088 = vmatprep.subr.mxu0 %v1087
        %v1089 = vand.u32 %v217, 4294901760
        %v1090 = vsub.f32 %v217, %v1089
        %v1091 = vand.u32 %v1090, 4294901760
        %v1092 = vsub.f32 %v1090, %v1091
        %v1093 = vand.u32 %v1092, 4294901760
        %1094 = vmatpush1.msra.mxu0 %v1093
        %v1095 = vand.u32 %v214, 4294901760
        %v1096 = vsub.f32 %v214, %v1095
        %v1097 = vand.u32 %v1096, 4294901760
        %v1098 = vsub.f32 %v1096, %v1097
        %v1099 = vand.u32 %v1098, 4294901760
        %1100 = vmatprep.subr.mxu0 %v1099
        %v1101 = vand.u32 %v213, 4294901760
        %v1102 = vsub.f32 %v213, %v1101
        %v1103 = vand.u32 %v1102, 4294901760
        %v1104 = vsub.f32 %v1102, %v1103
        %v1105 = vand.u32 %v1104, 4294901760
        %1106 = vmatpush1.msra.mxu0 %v1105
        %v1107 = vand.u32 %v210, 4294901760
        %v1108 = vsub.f32 %v210, %v1107
        %v1109 = vand.u32 %v1108, 4294901760
        %v1110 = vsub.f32 %v1108, %v1109
        %v1111 = vand.u32 %v1110, 4294901760
        %1112 = vmatprep.subr.mxu0 %v1111
        %v1113 = vand.u32 %v209, 4294901760
        %v1114 = vsub.f32 %v209, %v1113
        %v1115 = vand.u32 %v1114, 4294901760
        %v1116 = vsub.f32 %v1114, %v1115
        %v1117 = vand.u32 %v1116, 4294901760
        %1118 = vmatpush1.msra.mxu0 %v1117
        %1119 = vmatprep.subr.mxu0 0.0
        %1120 = vmatpush2.msra.mxu0 0.0
        %1121 = vmatprep.subr.mxu0 0.0
        %1122 = vmatpush2.msra.mxu0 0.0
        %1123 = vmatprep.subr.mxu0 0.0
        %1124 = vmatpush2.msra.mxu0 0.0
        %1125 = vmatprep.subr.mxu0 0.0
        %1126 = vmatpush2.msra.mxu0 0.0
        %1127 = vmatprep.subr.mxu0 0.0
        %1128 = vmatpush2.msra.mxu0 0.0
        %1129 = vmatprep.subr.mxu0 0.0
        %1130 = vmatpush2.msra.mxu0 0.0
        %1131 = vmatprep.subr.mxu0 0.0
        %1132 = vmatpush2.msra.mxu0 0.0
        %1133 = vmatprep.subr.mxu0 0.0
        %1134 = vmatpush2.msra.mxu0 0.0
        %1135 = vmatprep.subr.mxu0 0.0
        %1136 = vmatpush2.msra.mxu0 0.0
        %1137 = vmatprep.subr.mxu0 0.0
        %1138 = vmatpush2.msra.mxu0 0.0
        %1139 = vmatprep.subr.mxu0 0.0
        %1140 = vmatpush2.msra.mxu0 0.0
        %1141 = vmatprep.subr.mxu0 0.0
        %1142 = vmatpush2.msra.mxu0 0.0
        %1143 = vmatprep.subr.mxu0 0.0
        %1144 = vmatpush2.msra.mxu0 0.0
        %1145 = vmatprep.subr.mxu0 0.0
        %1146 = vmatpush2.msra.mxu0 0.0
        %1147 = vmatprep.subr.mxu0 0.0
        %1148 = vmatpush2.msra.mxu0 0.0
        %1149 = vmatprep.subr.mxu0 0.0
        %1150 = vmatpush2.msra.mxu0 0.0
        %1151 = vmatprep.mubr.f32.mxu0 0.0
        %v1152 = vand.u32 %v229, 4294901760
        %1153 = vmatmul.mubr.f32.gmra.mxu0 %v1152
        %v1154 = vpop.f32.mrf.mxu0
        %v1155 = vadd.f32 %v1010, %v1154
        %v1156 = vpop.f32.mrf.mxu0
        %v1157 = vadd.f32 %v1012, %v1156
        %1158 = vmatprep.mubr.f32.mxu0 0.0
        %v1159 = vand.u32 %v232, 4294901760
        %1160 = vmatmul.mubr.f32.gmra.mxu0 %v1159
        %v1161 = vpop.f32.mrf.mxu0
        %v1162 = vadd.f32 %v1021, %v1161
        %v1163 = vpop.f32.mrf.mxu0
        %v1164 = vadd.f32 %v1023, %v1163
        %1165 = vmatprep.mubr.f32.mxu0 0.0
        %v1166 = vand.u32 %v235, 4294901760
        %1167 = vmatmul.mubr.f32.gmra.mxu0 %v1166
        %v1168 = vpop.f32.mrf.mxu0
        %v1169 = vadd.f32 %v1032, %v1168
        %v1170 = vpop.f32.mrf.mxu0
        %v1171 = vadd.f32 %v1034, %v1170
        %1172 = vmatprep.mubr.f32.mxu0 0.0
        %v1173 = vand.u32 %v238, 4294901760
        %1174 = vmatmul.mubr.f32.gmra.mxu0 %v1173
        %v1175 = vpop.f32.mrf.mxu0
        %v1176 = vadd.f32 %v1043, %v1175
        %v1177 = vpop.f32.mrf.mxu0
        %v1178 = vadd.f32 %v1045, %v1177
        %1179 = vdwg.mxu0
        %1180 = vmatprep.subr.mxu0 0.0
        %1181 = vmatpush1.msra.mxu0 0.0
        %1182 = vmatprep.subr.mxu0 0.0
        %1183 = vmatpush1.msra.mxu0 0.0
        %1184 = vmatprep.subr.mxu0 0.0
        %1185 = vmatpush1.msra.mxu0 0.0
        %1186 = vmatprep.subr.mxu0 0.0
        %1187 = vmatpush1.msra.mxu0 0.0
        %1188 = vmatprep.subr.mxu0 0.0
        %1189 = vmatpush1.msra.mxu0 0.0
        %1190 = vmatprep.subr.mxu0 0.0
        %1191 = vmatpush1.msra.mxu0 0.0
        %1192 = vmatprep.subr.mxu0 0.0
        %1193 = vmatpush1.msra.mxu0 0.0
        %1194 = vmatprep.subr.mxu0 0.0
        %1195 = vmatpush1.msra.mxu0 0.0
        %1196 = vmatprep.subr.mxu0 0.0
        %1197 = vmatpush1.msra.mxu0 0.0
        %1198 = vmatprep.subr.mxu0 0.0
        %1199 = vmatpush1.msra.mxu0 0.0
        %1200 = vmatprep.subr.mxu0 0.0
        %1201 = vmatpush1.msra.mxu0 0.0
        %1202 = vmatprep.subr.mxu0 0.0
        %1203 = vmatpush1.msra.mxu0 0.0
        %v1204 = vand.u32 %v222, 4294901760
        %v1205 = vsub.f32 %v222, %v1204
        %1206 = vmatprep.subr.mxu0 %v1205
        %v1207 = vand.u32 %v221, 4294901760
        %v1208 = vsub.f32 %v221, %v1207
        %1209 = vmatpush1.msra.mxu0 %v1208
        %v1210 = vand.u32 %v218, 4294901760
        %v1211 = vsub.f32 %v218, %v1210
        %1212 = vmatprep.subr.mxu0 %v1211
        %v1213 = vand.u32 %v217, 4294901760
        %v1214 = vsub.f32 %v217, %v1213
        %1215 = vmatpush1.msra.mxu0 %v1214
        %v1216 = vand.u32 %v214, 4294901760
        %v1217 = vsub.f32 %v214, %v1216
        %1218 = vmatprep.subr.mxu0 %v1217
        %v1219 = vand.u32 %v213, 4294901760
        %v1220 = vsub.f32 %v213, %v1219
        %1221 = vmatpush1.msra.mxu0 %v1220
        %v1222 = vand.u32 %v210, 4294901760
        %v1223 = vsub.f32 %v210, %v1222
        %1224 = vmatprep.subr.mxu0 %v1223
        %v1225 = vand.u32 %v209, 4294901760
        %v1226 = vsub.f32 %v209, %v1225
        %1227 = vmatpush1.msra.mxu0 %v1226
        %1228 = vmatprep.subr.mxu0 0.0
        %1229 = vmatpush2.msra.mxu0 0.0
        %1230 = vmatprep.subr.mxu0 0.0
        %1231 = vmatpush2.msra.mxu0 0.0
        %1232 = vmatprep.subr.mxu0 0.0
        %1233 = vmatpush2.msra.mxu0 0.0
        %1234 = vmatprep.subr.mxu0 0.0
        %1235 = vmatpush2.msra.mxu0 0.0
        %1236 = vmatprep.subr.mxu0 0.0
        %1237 = vmatpush2.msra.mxu0 0.0
        %1238 = vmatprep.subr.mxu0 0.0
        %1239 = vmatpush2.msra.mxu0 0.0
        %1240 = vmatprep.subr.mxu0 0.0
        %1241 = vmatpush2.msra.mxu0 0.0
        %1242 = vmatprep.subr.mxu0 0.0
        %1243 = vmatpush2.msra.mxu0 0.0
        %1244 = vmatprep.subr.mxu0 0.0
        %1245 = vmatpush2.msra.mxu0 0.0
        %1246 = vmatprep.subr.mxu0 0.0
        %1247 = vmatpush2.msra.mxu0 0.0
        %1248 = vmatprep.subr.mxu0 0.0
        %1249 = vmatpush2.msra.mxu0 0.0
        %1250 = vmatprep.subr.mxu0 0.0
        %1251 = vmatpush2.msra.mxu0 0.0
        %1252 = vmatprep.subr.mxu0 0.0
        %1253 = vmatpush2.msra.mxu0 0.0
        %1254 = vmatprep.subr.mxu0 0.0
        %1255 = vmatpush2.msra.mxu0 0.0
        %1256 = vmatprep.subr.mxu0 0.0
        %1257 = vmatpush2.msra.mxu0 0.0
        %1258 = vmatprep.subr.mxu0 0.0
        %1259 = vmatpush2.msra.mxu0 0.0
        %1260 = vmatprep.mubr.f32.mxu0 0.0
        %v1261 = vand.u32 %v229, 4294901760
        %v1262 = vsub.f32 %v229, %v1261
        %1263 = vmatmul.mubr.f32.gmra.mxu0 %v1262
        %v1264 = vpop.f32.mrf.mxu0
        %v1265 = vadd.f32 %v1155, %v1264
        %v1266 = vpop.f32.mrf.mxu0
        %v1267 = vadd.f32 %v1157, %v1266
        %1268 = vmatprep.mubr.f32.mxu0 0.0
        %v1269 = vand.u32 %v232, 4294901760
        %v1270 = vsub.f32 %v232, %v1269
        %1271 = vmatmul.mubr.f32.gmra.mxu0 %v1270
        %v1272 = vpop.f32.mrf.mxu0
        %v1273 = vadd.f32 %v1162, %v1272
        %v1274 = vpop.f32.mrf.mxu0
        %v1275 = vadd.f32 %v1164, %v1274
        %1276 = vmatprep.mubr.f32.mxu0 0.0
        %v1277 = vand.u32 %v235, 4294901760
        %v1278 = vsub.f32 %v235, %v1277
        %1279 = vmatmul.mubr.f32.gmra.mxu0 %v1278
        %v1280 = vpop.f32.mrf.mxu0
        %v1281 = vadd.f32 %v1169, %v1280
        %v1282 = vpop.f32.mrf.mxu0
        %v1283 = vadd.f32 %v1171, %v1282
        %1284 = vmatprep.mubr.f32.mxu0 0.0
        %v1285 = vand.u32 %v238, 4294901760
        %v1286 = vsub.f32 %v238, %v1285
        %1287 = vmatmul.mubr.f32.gmra.mxu0 %v1286
        %v1288 = vpop.f32.mrf.mxu0
        %v1289 = vadd.f32 %v1176, %v1288
        %v1290 = vpop.f32.mrf.mxu0
        %v1291 = vadd.f32 %v1178, %v1290
        %1292 = vdwg.mxu0
        %1293 = vmatprep.subr.mxu0 0.0
        %1294 = vmatpush1.msra.mxu0 0.0
        %1295 = vmatprep.subr.mxu0 0.0
        %1296 = vmatpush1.msra.mxu0 0.0
        %1297 = vmatprep.subr.mxu0 0.0
        %1298 = vmatpush1.msra.mxu0 0.0
        %1299 = vmatprep.subr.mxu0 0.0
        %1300 = vmatpush1.msra.mxu0 0.0
        %1301 = vmatprep.subr.mxu0 0.0
        %1302 = vmatpush1.msra.mxu0 0.0
        %1303 = vmatprep.subr.mxu0 0.0
        %1304 = vmatpush1.msra.mxu0 0.0
        %1305 = vmatprep.subr.mxu0 0.0
        %1306 = vmatpush1.msra.mxu0 0.0
        %1307 = vmatprep.subr.mxu0 0.0
        %1308 = vmatpush1.msra.mxu0 0.0
        %1309 = vmatprep.subr.mxu0 0.0
        %1310 = vmatpush1.msra.mxu0 0.0
        %1311 = vmatprep.subr.mxu0 0.0
        %1312 = vmatpush1.msra.mxu0 0.0
        %1313 = vmatprep.subr.mxu0 0.0
        %1314 = vmatpush1.msra.mxu0 0.0
        %1315 = vmatprep.subr.mxu0 0.0
        %1316 = vmatpush1.msra.mxu0 0.0
        %v1317 = vand.u32 %v222, 4294901760
        %1318 = vmatprep.subr.mxu0 %v1317
        %v1319 = vand.u32 %v221, 4294901760
        %1320 = vmatpush1.msra.mxu0 %v1319
        %v1321 = vand.u32 %v218, 4294901760
        %1322 = vmatprep.subr.mxu0 %v1321
        %v1323 = vand.u32 %v217, 4294901760
        %1324 = vmatpush1.msra.mxu0 %v1323
        %v1325 = vand.u32 %v214, 4294901760
        %1326 = vmatprep.subr.mxu0 %v1325
        %v1327 = vand.u32 %v213, 4294901760
        %1328 = vmatpush1.msra.mxu0 %v1327
        %v1329 = vand.u32 %v210, 4294901760
        %1330 = vmatprep.subr.mxu0 %v1329
        %v1331 = vand.u32 %v209, 4294901760
        %1332 = vmatpush1.msra.mxu0 %v1331
        %1333 = vmatprep.subr.mxu0 0.0
        %1334 = vmatpush2.msra.mxu0 0.0
        %1335 = vmatprep.subr.mxu0 0.0
        %1336 = vmatpush2.msra.mxu0 0.0
        %1337 = vmatprep.subr.mxu0 0.0
        %1338 = vmatpush2.msra.mxu0 0.0
        %1339 = vmatprep.subr.mxu0 0.0
        %1340 = vmatpush2.msra.mxu0 0.0
        %1341 = vmatprep.subr.mxu0 0.0
        %1342 = vmatpush2.msra.mxu0 0.0
        %1343 = vmatprep.subr.mxu0 0.0
        %1344 = vmatpush2.msra.mxu0 0.0
        %1345 = vmatprep.subr.mxu0 0.0
        %1346 = vmatpush2.msra.mxu0 0.0
        %1347 = vmatprep.subr.mxu0 0.0
        %1348 = vmatpush2.msra.mxu0 0.0
        %1349 = vmatprep.subr.mxu0 0.0
        %1350 = vmatpush2.msra.mxu0 0.0
        %1351 = vmatprep.subr.mxu0 0.0
        %1352 = vmatpush2.msra.mxu0 0.0
        %1353 = vmatprep.subr.mxu0 0.0
        %1354 = vmatpush2.msra.mxu0 0.0
        %1355 = vmatprep.subr.mxu0 0.0
        %1356 = vmatpush2.msra.mxu0 0.0
        %1357 = vmatprep.subr.mxu0 0.0
        %1358 = vmatpush2.msra.mxu0 0.0
        %1359 = vmatprep.subr.mxu0 0.0
        %1360 = vmatpush2.msra.mxu0 0.0
        %1361 = vmatprep.subr.mxu0 0.0
        %1362 = vmatpush2.msra.mxu0 0.0
        %1363 = vmatprep.subr.mxu0 0.0
        %1364 = vmatpush2.msra.mxu0 0.0
        %1365 = vmatprep.mubr.f32.mxu0 0.0
        %v1366 = vand.u32 %v229, 4294901760
        %v1367 = vsub.f32 %v229, %v1366
        %v1368 = vand.u32 %v1367, 4294901760
        %1369 = vmatmul.mubr.f32.gmra.mxu0 %v1368
        %v1370 = vpop.f32.mrf.mxu0
        %v1371 = vadd.f32 %v1265, %v1370
        %v1372 = vpop.f32.mrf.mxu0
        %v1373 = vadd.f32 %v1267, %v1372
        %1374 = vmatprep.mubr.f32.mxu0 0.0
        %v1375 = vand.u32 %v232, 4294901760
        %v1376 = vsub.f32 %v232, %v1375
        %v1377 = vand.u32 %v1376, 4294901760
        %1378 = vmatmul.mubr.f32.gmra.mxu0 %v1377
        %v1379 = vpop.f32.mrf.mxu0
        %v1380 = vadd.f32 %v1273, %v1379
        %v1381 = vpop.f32.mrf.mxu0
        %v1382 = vadd.f32 %v1275, %v1381
        %1383 = vmatprep.mubr.f32.mxu0 0.0
        %v1384 = vand.u32 %v235, 4294901760
        %v1385 = vsub.f32 %v235, %v1384
        %v1386 = vand.u32 %v1385, 4294901760
        %1387 = vmatmul.mubr.f32.gmra.mxu0 %v1386
        %v1388 = vpop.f32.mrf.mxu0
        %v1389 = vadd.f32 %v1281, %v1388
        %v1390 = vpop.f32.mrf.mxu0
        %v1391 = vadd.f32 %v1283, %v1390
        %1392 = vmatprep.mubr.f32.mxu0 0.0
        %v1393 = vand.u32 %v238, 4294901760
        %v1394 = vsub.f32 %v238, %v1393
        %v1395 = vand.u32 %v1394, 4294901760
        %1396 = vmatmul.mubr.f32.gmra.mxu0 %v1395
        %v1397 = vpop.f32.mrf.mxu0
        %v1398 = vadd.f32 %v1289, %v1397
        %v1399 = vpop.f32.mrf.mxu0
        %v1400 = vadd.f32 %v1291, %v1399
        %1401 = vdwg.mxu0
        %1402 = vmatprep.subr.mxu0 0.0
        %1403 = vmatpush1.msra.mxu0 0.0
        %1404 = vmatprep.subr.mxu0 0.0
        %1405 = vmatpush1.msra.mxu0 0.0
        %1406 = vmatprep.subr.mxu0 0.0
        %1407 = vmatpush1.msra.mxu0 0.0
        %1408 = vmatprep.subr.mxu0 0.0
        %1409 = vmatpush1.msra.mxu0 0.0
        %1410 = vmatprep.subr.mxu0 0.0
        %1411 = vmatpush1.msra.mxu0 0.0
        %1412 = vmatprep.subr.mxu0 0.0
        %1413 = vmatpush1.msra.mxu0 0.0
        %1414 = vmatprep.subr.mxu0 0.0
        %1415 = vmatpush1.msra.mxu0 0.0
        %1416 = vmatprep.subr.mxu0 0.0
        %1417 = vmatpush1.msra.mxu0 0.0
        %1418 = vmatprep.subr.mxu0 0.0
        %1419 = vmatpush1.msra.mxu0 0.0
        %1420 = vmatprep.subr.mxu0 0.0
        %1421 = vmatpush1.msra.mxu0 0.0
        %1422 = vmatprep.subr.mxu0 0.0
        %1423 = vmatpush1.msra.mxu0 0.0
        %1424 = vmatprep.subr.mxu0 0.0
        %1425 = vmatpush1.msra.mxu0 0.0
        %v1426 = vand.u32 %v222, 4294901760
        %v1427 = vsub.f32 %v222, %v1426
        %v1428 = vand.u32 %v1427, 4294901760
        %1429 = vmatprep.subr.mxu0 %v1428
        %v1430 = vand.u32 %v221, 4294901760
        %v1431 = vsub.f32 %v221, %v1430
        %v1432 = vand.u32 %v1431, 4294901760
        %1433 = vmatpush1.msra.mxu0 %v1432
        %v1434 = vand.u32 %v218, 4294901760
        %v1435 = vsub.f32 %v218, %v1434
        %v1436 = vand.u32 %v1435, 4294901760
        %1437 = vmatprep.subr.mxu0 %v1436
        %v1438 = vand.u32 %v217, 4294901760
        %v1439 = vsub.f32 %v217, %v1438
        %v1440 = vand.u32 %v1439, 4294901760
        %1441 = vmatpush1.msra.mxu0 %v1440
        %v1442 = vand.u32 %v214, 4294901760
        %v1443 = vsub.f32 %v214, %v1442
        %v1444 = vand.u32 %v1443, 4294901760
        %1445 = vmatprep.subr.mxu0 %v1444
        %v1446 = vand.u32 %v213, 4294901760
        %v1447 = vsub.f32 %v213, %v1446
        %v1448 = vand.u32 %v1447, 4294901760
        %1449 = vmatpush1.msra.mxu0 %v1448
        %v1450 = vand.u32 %v210, 4294901760
        %v1451 = vsub.f32 %v210, %v1450
        %v1452 = vand.u32 %v1451, 4294901760
        %1453 = vmatprep.subr.mxu0 %v1452
        %v1454 = vand.u32 %v209, 4294901760
        %v1455 = vsub.f32 %v209, %v1454
        %v1456 = vand.u32 %v1455, 4294901760
        %1457 = vmatpush1.msra.mxu0 %v1456
        %1458 = vmatprep.subr.mxu0 0.0
        %1459 = vmatpush2.msra.mxu0 0.0
        %1460 = vmatprep.subr.mxu0 0.0
        %1461 = vmatpush2.msra.mxu0 0.0
        %1462 = vmatprep.subr.mxu0 0.0
        %1463 = vmatpush2.msra.mxu0 0.0
        %1464 = vmatprep.subr.mxu0 0.0
        %1465 = vmatpush2.msra.mxu0 0.0
        %1466 = vmatprep.subr.mxu0 0.0
        %1467 = vmatpush2.msra.mxu0 0.0
        %1468 = vmatprep.subr.mxu0 0.0
        %1469 = vmatpush2.msra.mxu0 0.0
        %1470 = vmatprep.subr.mxu0 0.0
        %1471 = vmatpush2.msra.mxu0 0.0
        %1472 = vmatprep.subr.mxu0 0.0
        %1473 = vmatpush2.msra.mxu0 0.0
        %1474 = vmatprep.subr.mxu0 0.0
        %1475 = vmatpush2.msra.mxu0 0.0
        %1476 = vmatprep.subr.mxu0 0.0
        %1477 = vmatpush2.msra.mxu0 0.0
        %1478 = vmatprep.subr.mxu0 0.0
        %1479 = vmatpush2.msra.mxu0 0.0
        %1480 = vmatprep.subr.mxu0 0.0
        %1481 = vmatpush2.msra.mxu0 0.0
        %1482 = vmatprep.subr.mxu0 0.0
        %1483 = vmatpush2.msra.mxu0 0.0
        %1484 = vmatprep.subr.mxu0 0.0
        %1485 = vmatpush2.msra.mxu0 0.0
        %1486 = vmatprep.subr.mxu0 0.0
        %1487 = vmatpush2.msra.mxu0 0.0
        %1488 = vmatprep.subr.mxu0 0.0
        %1489 = vmatpush2.msra.mxu0 0.0
        %1490 = vmatprep.mubr.f32.mxu0 0.0
        %v1491 = vand.u32 %v229, 4294901760
        %1492 = vmatmul.mubr.f32.gmra.mxu0 %v1491
        %v1493 = vpop.f32.mrf.mxu0
        %v1494 = vadd.f32 %v1371, %v1493
        %v1495 = vpop.f32.mrf.mxu0
        %v1496 = vadd.f32 %v1373, %v1495
        %1497 = vmatprep.mubr.f32.mxu0 0.0
        %v1498 = vand.u32 %v232, 4294901760
        %1499 = vmatmul.mubr.f32.gmra.mxu0 %v1498
        %v1500 = vpop.f32.mrf.mxu0
        %v1501 = vadd.f32 %v1380, %v1500
        %v1502 = vpop.f32.mrf.mxu0
        %v1503 = vadd.f32 %v1382, %v1502
        %1504 = vmatprep.mubr.f32.mxu0 0.0
        %v1505 = vand.u32 %v235, 4294901760
        %1506 = vmatmul.mubr.f32.gmra.mxu0 %v1505
        %v1507 = vpop.f32.mrf.mxu0
        %v1508 = vadd.f32 %v1389, %v1507
        %v1509 = vpop.f32.mrf.mxu0
        %v1510 = vadd.f32 %v1391, %v1509
        %1511 = vmatprep.mubr.f32.mxu0 0.0
        %v1512 = vand.u32 %v238, 4294901760
        %1513 = vmatmul.mubr.f32.gmra.mxu0 %v1512
        %v1514 = vpop.f32.mrf.mxu0
        %v1515 = vadd.f32 %v1398, %v1514
        %v1516 = vpop.f32.mrf.mxu0
        %v1517 = vadd.f32 %v1400, %v1516
        %1518 = vdwg.mxu0
        %1519 = vmatprep.subr.mxu0 0.0
        %1520 = vmatpush1.msra.mxu0 0.0
        %1521 = vmatprep.subr.mxu0 0.0
        %1522 = vmatpush1.msra.mxu0 0.0
        %1523 = vmatprep.subr.mxu0 0.0
        %1524 = vmatpush1.msra.mxu0 0.0
        %1525 = vmatprep.subr.mxu0 0.0
        %1526 = vmatpush1.msra.mxu0 0.0
        %1527 = vmatprep.subr.mxu0 0.0
        %1528 = vmatpush1.msra.mxu0 0.0
        %1529 = vmatprep.subr.mxu0 0.0
        %1530 = vmatpush1.msra.mxu0 0.0
        %1531 = vmatprep.subr.mxu0 0.0
        %1532 = vmatpush1.msra.mxu0 0.0
        %1533 = vmatprep.subr.mxu0 0.0
        %1534 = vmatpush1.msra.mxu0 0.0
        %1535 = vmatprep.subr.mxu0 0.0
        %1536 = vmatpush1.msra.mxu0 0.0
        %1537 = vmatprep.subr.mxu0 0.0
        %1538 = vmatpush1.msra.mxu0 0.0
        %1539 = vmatprep.subr.mxu0 0.0
        %1540 = vmatpush1.msra.mxu0 0.0
        %1541 = vmatprep.subr.mxu0 0.0
        %1542 = vmatpush1.msra.mxu0 0.0
        %v1543 = vand.u32 %v222, 4294901760
        %1544 = vmatprep.subr.mxu0 %v1543
        %v1545 = vand.u32 %v221, 4294901760
        %1546 = vmatpush1.msra.mxu0 %v1545
        %v1547 = vand.u32 %v218, 4294901760
        %1548 = vmatprep.subr.mxu0 %v1547
        %v1549 = vand.u32 %v217, 4294901760
        %1550 = vmatpush1.msra.mxu0 %v1549
        %v1551 = vand.u32 %v214, 4294901760
        %1552 = vmatprep.subr.mxu0 %v1551
        %v1553 = vand.u32 %v213, 4294901760
        %1554 = vmatpush1.msra.mxu0 %v1553
        %v1555 = vand.u32 %v210, 4294901760
        %1556 = vmatprep.subr.mxu0 %v1555
        %v1557 = vand.u32 %v209, 4294901760
        %1558 = vmatpush1.msra.mxu0 %v1557
        %1559 = vmatprep.subr.mxu0 0.0
        %1560 = vmatpush2.msra.mxu0 0.0
        %1561 = vmatprep.subr.mxu0 0.0
        %1562 = vmatpush2.msra.mxu0 0.0
        %1563 = vmatprep.subr.mxu0 0.0
        %1564 = vmatpush2.msra.mxu0 0.0
        %1565 = vmatprep.subr.mxu0 0.0
        %1566 = vmatpush2.msra.mxu0 0.0
        %1567 = vmatprep.subr.mxu0 0.0
        %1568 = vmatpush2.msra.mxu0 0.0
        %1569 = vmatprep.subr.mxu0 0.0
        %1570 = vmatpush2.msra.mxu0 0.0
        %1571 = vmatprep.subr.mxu0 0.0
        %1572 = vmatpush2.msra.mxu0 0.0
        %1573 = vmatprep.subr.mxu0 0.0
        %1574 = vmatpush2.msra.mxu0 0.0
        %1575 = vmatprep.subr.mxu0 0.0
        %1576 = vmatpush2.msra.mxu0 0.0
        %1577 = vmatprep.subr.mxu0 0.0
        %1578 = vmatpush2.msra.mxu0 0.0
        %1579 = vmatprep.subr.mxu0 0.0
        %1580 = vmatpush2.msra.mxu0 0.0
        %1581 = vmatprep.subr.mxu0 0.0
        %1582 = vmatpush2.msra.mxu0 0.0
        %1583 = vmatprep.subr.mxu0 0.0
        %1584 = vmatpush2.msra.mxu0 0.0
        %1585 = vmatprep.subr.mxu0 0.0
        %1586 = vmatpush2.msra.mxu0 0.0
        %1587 = vmatprep.subr.mxu0 0.0
        %1588 = vmatpush2.msra.mxu0 0.0
        %1589 = vmatprep.subr.mxu0 0.0
        %1590 = vmatpush2.msra.mxu0 0.0
        %1591 = vmatprep.mubr.f32.mxu0 0.0
        %v1592 = vand.u32 %v229, 4294901760
        %1593 = vmatmul.mubr.f32.gmra.mxu0 %v1592
        %v1594 = vpop.f32.mrf.mxu0
        %v1595 = vadd.f32 %v1494, %v1594
        %v1596 = vpop.f32.mrf.mxu0
        %v1597 = vadd.f32 %v1496, %v1596
        %1598 = vmatprep.mubr.f32.mxu0 0.0
        %v1599 = vand.u32 %v232, 4294901760
        %1600 = vmatmul.mubr.f32.gmra.mxu0 %v1599
        %v1601 = vpop.f32.mrf.mxu0
        %v1602 = vadd.f32 %v1501, %v1601
        %v1603 = vpop.f32.mrf.mxu0
        %v1604 = vadd.f32 %v1503, %v1603
        %1605 = vmatprep.mubr.f32.mxu0 0.0
        %v1606 = vand.u32 %v235, 4294901760
        %1607 = vmatmul.mubr.f32.gmra.mxu0 %v1606
        %v1608 = vpop.f32.mrf.mxu0
        %v1609 = vadd.f32 %v1508, %v1608
        %v1610 = vpop.f32.mrf.mxu0
        %v1611 = vadd.f32 %v1510, %v1610
        %1612 = vmatprep.mubr.f32.mxu0 0.0
        %v1613 = vand.u32 %v238, 4294901760
        %1614 = vmatmul.mubr.f32.gmra.mxu0 %v1613
        %v1615 = vpop.f32.mrf.mxu0
        %v1616 = vadd.f32 %v1515, %v1615
        %v1617 = vpop.f32.mrf.mxu0
        %v1618 = vadd.f32 %v1517, %v1617
        %1619 = vdwg.mxu0
        %vm1620 = vcmask 64512
        %1621 = vst.msk [vmem:[%s205] sm:$0xff] %vm1620, %v905
        %1622 = vst.msk [vmem:[%s205 + $0x8] sm:$0xff] %vm1620, %v912
        %1623 = vst.msk [vmem:[%s205 + $0x10] sm:$0xff] %vm1620, %v919
        %1624 = vst.msk [vmem:[%s205 + $0x18] sm:$0xff] %vm1620, %v926
        %s1625 = scalar_lea.vmem %s205, 32
        %1626 = vst.msk [vmem:[%s1625] sm:$0xff] %vm1620, %v907
        %1627 = vst.msk [vmem:[%s1625 + $0x8] sm:$0xff] %vm1620, %v914
        %1628 = vst.msk [vmem:[%s1625 + $0x10] sm:$0xff] %vm1620, %v921
        %1629 = vst.msk [vmem:[%s1625 + $0x18] sm:$0xff] %vm1620, %v928
        %s1630 = scalar_lea.vmem %s205, 64
        %1631 = vst.msk [vmem:[%s1630] sm:$0xff] %vm1620, %v1595
        %1632 = vst.msk [vmem:[%s1630 + $0x8] sm:$0xff] %vm1620, %v1602
        %1633 = vst.msk [vmem:[%s1630 + $0x10] sm:$0xff] %vm1620, %v1609
        %1634 = vst.msk [vmem:[%s1630 + $0x18] sm:$0xff] %vm1620, %v1616
        %s1635 = scalar_lea.vmem %s205, 96
        %1636 = vst.msk [vmem:[%s1635] sm:$0xff] %vm1620, %v1597
        %1637 = vst.msk [vmem:[%s1635 + $0x8] sm:$0xff] %vm1620, %v1604
        %1638 = vst.msk [vmem:[%s1635 + $0x10] sm:$0xff] %vm1620, %v1611
        %1639 = vst.msk [vmem:[%s1635 + $0x18] sm:$0xff] %vm1620, %v1618
        %s1640 = smul.u32 4, %s22
        %p1641 = scmp.lt.s32.totalorder %s21, 1
        %s1642 = scalar_select %p1641, %s21, 1
        %p1643 = scmp.lt.s32.totalorder %s1640, 3
        %s1644 = scalar_select %p1643, %s1640, 3
        %s1645 = smul.addr %s1642, 16
        %s1646 = sadd.s32 %s1644, %s1645
        %s1647 = smul.addr %s1646, 8
        %s1648 = scalar_lea.vmem %s2, %s1647
        // Predicated region
        $region37: #{tpu_custom_call.1} parent=27 // pred_check
          %p1649 = pneg %p98
        $region38: #{tpu_custom_call.1} parent=27 // pred_check_branch
          %1651 = sbr.rel (%p1649) target = $region40
        $region39: #{tpu_custom_call.1} parent=27 // pred_region
          %s1652 = smul.u32 4, %s22
        $region40: #{tpu_custom_call.1} parent=27 // pred_fallthru
          _
      $region28: #{tpu_custom_call.1} parent=5 // pred_fallthru
        _
      %p1653 = scmp.le.s32.totalorder 2, %s12
      // Predicated region
      $region41: #{tpu_custom_call.1} parent=5 // pred_check
        %p1654 = pneg %p1653
      $region42: #{tpu_custom_call.1} parent=5 // pred_check_branch
        %1656 = sbr.rel (%p1654) target = $region44
      $region43: #{tpu_custom_call.1} parent=5 // pred_region
        %s1657 = ssub.s32 %s12, 2
        // Predicated region
        $region45: #{tpu_custom_call.1} parent=43 // pred_check
          %p1658 = pneg %p104
        $region46: #{tpu_custom_call.1} parent=43 // pred_check_branch
          %1660 = sbr.rel (%p1658) target = $region48
        $region47: #{tpu_custom_call.1} parent=43 // pred_region
          %s1661 = smul.u32 4, %s24
          %p1662 = scmp.lt.s32.totalorder %s23, 1
          %s1663 = scalar_select %p1662, %s23, 1
          %p1664 = scmp.lt.s32.totalorder %s1661, 3
          %s1665 = scalar_select %p1664, %s1661, 3
          %s1666 = smul.addr %s1663, 16
          %s1667 = sadd.s32 %s1665, %s1666
          %s1668 = smul.addr %s1667, 8
          %s1669 = scalar_lea.vmem %s2, %s1668
        $region48: #{tpu_custom_call.1} parent=43 // pred_fallthru
          _
      $region44: #{tpu_custom_call.1} parent=5 // pred_fallthru
        _
    $region6: #{tpu_custom_call.1} parent=1 // loop_footer
      %s16 = sadd.s32 1, %s12
    $region7: #{tpu_custom_call.1} parent=1 // loop_footer_branch
      %11 = sbr.rel target = $region3
    $region8: #{tpu_custom_call.1} parent=1 // loop_exit
      _
    %1670 = vsyncpa [#allocation3], 1
    %s1671 = scalar_lea.sflag [#allocation3], 1
    %1672 = vsyncpa %s1671, 1
    %1673 = vsyncpa [#allocation5], 1
    %s1674 = scalar_lea.sflag [#allocation5], 1
    %1675 = vsyncpa %s1674, 1

</llo_original>
